<compile_context>
chip_gen: v5e
topology: v5e:2x2
jax: 0.10.0
libtpu: 0.0.40
codegen_flags: <defaults>
</compile_context>

<pallas_src>
import numpy as np
import jax
import jax.numpy as jnp
from jax.experimental import pallas as pl
from jax.experimental.pallas import tpu as pltpu

_B_TILE = 8          # samples per grid step (sublane-aligned)
_C1, _C2 = 64, 128   # conv channel widths from the nn.Module


def make_kernel(BT, L, H):
    L1 = L // 2          # after MaxPool1d(2,2)
    Tp = L1 // 2         # after second MaxPool1d(2,2)  (LSTM sequence length)
    f32 = jnp.float32

    def sigmoid(z):
        # 1/(1+exp(-z)): exp on the EUP, divide as approx reciprocal (also EUP).
        return pl.reciprocal(1.0 + jnp.exp(-z), approx=True)

    def kernel(x_ref, w1_ref, b1_ref, pe1_ref, po1_ref, sl2_ref, sr2_ref,
               w2_ref, b2_ref, pe2_ref, po2_ref, wfc_ref, bfc_ref,
               wih_ref, whh_ref, bl_ref, wa_ref, ba_ref, wo_ref, bo_ref,
               y_ref, attn_ref, cat_ref, lstm_ref):
        dot = lambda a, b: jnp.dot(a, b, preferred_element_type=f32)

        # ---- Conv1d(Cin->64, k=3, pad=1) + ReLU: taps pre-concatenated along lanes ----
        h1 = jnp.maximum(dot(x_ref[...], w1_ref[...]) + b1_ref[...], 0.0)       # (BT*L, 64)

        # ---- MaxPool1d(2,2): max of even/odd row selections (VMEM-resident selectors) ----
        p1 = jnp.maximum(dot(pe1_ref[...], h1), dot(po1_ref[...], h1))          # (BT*L1, 64)

        # ---- Conv1d(64->128, k=3, pad=1) + ReLU: assemble taps in scratch, ONE matmul ----
        cat_ref[:, pl.ds(_C1, _C1)] = p1                                        # center tap
        cat_ref[:, pl.ds(0, _C1)] = dot(sl2_ref[...], p1)                       # p1[t-1]
        cat_ref[:, pl.ds(2 * _C1, _C1)] = dot(sr2_ref[...], p1)                 # p1[t+1]
        h2 = jnp.maximum(dot(cat_ref[...], w2_ref[...]) + b2_ref[...], 0.0)     # (BT*L1, 128)

        # ---- MaxPool1d(2,2): selectors also transpose to time-major rows (t*BT + b) ----
        p2 = jnp.maximum(dot(pe2_ref[...], h2), dot(po2_ref[...], h2))          # (BT*Tp, 128)

        # ---- fc: Linear(128 -> H) ----
        mapped = dot(p2, wfc_ref[...]) + bfc_ref[...]                           # (BT*Tp, H)

        # ---- LSTM(H->H): input-gate contribution hoisted out of the recurrence ----
        gates_x = dot(mapped, wih_ref[...]) + bl_ref[...]                       # (BT*Tp, 4H)
        whh = whh_ref[...]                                                      # (H, 4H)
        h = jnp.zeros((BT, H), f32)
        c = jnp.zeros((BT, H), f32)
        # Tp = L//4 is small here; for long sequences switch to lax.fori_loop(..., unroll=True).
        for t in range(Tp):
            g = gates_x[t * BT:(t + 1) * BT, :] + dot(h, whh)                   # (BT, 4H)
            i_g = sigmoid(g[:, 0:H])            # gate order matches PyTorch: [i, f, g, o]
            f_g = sigmoid(g[:, H:2 * H])
            g_g = jnp.tanh(g[:, 2 * H:3 * H])
            o_g = sigmoid(g[:, 3 * H:4 * H])
            c = f_g * c + i_g * g_g
            h = o_g * jnp.tanh(c)
            lstm_ref[pl.ds(t * BT, BT), :] = h                                  # direct scratch write

        lstm_all = lstm_ref[...]                                                # (BT*Tp, H)
        scores = dot(lstm_all, wa_ref[...]) + ba_ref[...]                       # (BT*Tp, H)

        # ---- Attention: softmax over TIME per (batch, hidden unit) ----
        sc = [scores[t * BT:(t + 1) * BT, :] for t in range(Tp)]                # each (BT, H)
        m = sc[0]
        for t in range(1, Tp):
            m = jnp.maximum(m, sc[t])
        es = [jnp.exp(s - m) for s in sc]
        tot = es[0]
        for t in range(1, Tp):
            tot = tot + es[t]
        inv = pl.reciprocal(tot, approx=True)

        ctx = jnp.zeros((BT, H), f32)
        for t in range(Tp):
            a_t = es[t] * inv                                                   # (BT, H)
            attn_ref[:, pl.ds(t * H, H)] = a_t                                  # lane window t*H:(t+1)*H
            ctx = ctx + a_t * lstm_all[t * BT:(t + 1) * BT, :]

        # ---- final Linear(H -> O), lane-padded to a dense store ----
        y_ref[...] = dot(ctx, wo_ref[...]) + bo_ref[...]                        # (BT, O_pad)

    return kernel


def conv_lstm_attention(x, params):
    """x: (B, L, C_in) float32. Returns (y (B, O), attn_scores (B, L//4, H))."""
    B, L, C_in = x.shape
    assert L >= 4, "need L >= 4 for the two MaxPool1d(2,2) stages"
    H = params["wfc"].shape[1]
    O = params["wo"].shape[1]
    L1, Tp = L // 2, (L // 2) // 2
    BT = _B_TILE
    B_pad = ((B + BT - 1) // BT) * BT
    nblk = B_pad // BT
    O_pad = ((O + 127) // 128) * 128
    f32 = jnp.float32

    # ---- conv1 taps built once in the wrapper: [x_{t-1} | x_t | x_{t+1}] along lanes ----
    xf = x.astype(f32)
    zrow = jnp.zeros((B, 1, C_in), f32)
    x_prev = jnp.concatenate([zrow, xf[:, :-1, :]], axis=1)
    x_next = jnp.concatenate([xf[:, 1:, :], zrow], axis=1)
    xcat = jnp.concatenate([x_prev, xf, x_next], axis=-1)               # (B, L, 3*C_in)
    if B_pad != B:
        xcat = jnp.concatenate(
            [xcat, jnp.zeros((B_pad - B, L, 3 * C_in), f32)], axis=0)
    x2d = xcat.reshape(B_pad * L, 3 * C_in)

    # ---- constant block-diagonal pool / shift selectors (built once, VMEM-resident) ----
    M1, M2, M3 = BT * L, BT * L1, BT * Tp
    pe1 = np.zeros((M2, M1), np.float32); po1 = np.zeros((M2, M1), np.float32)
    sl2 = np.zeros((M2, M2), np.float32); sr2 = np.zeros((M2, M2), np.float32)
    pe2 = np.zeros((M3, M2), np.float32); po2 = np.zeros((M3, M2), np.float32)
    for b in range(BT):
        for t in range(L1):
            pe1[b * L1 + t, b * L + 2 * t] = 1.0
            po1[b * L1 + t, b * L + 2 * t + 1] = 1.0
            if t > 0:
                sl2[b * L1 + t, b * L1 + t - 1] = 1.0
            if t < L1 - 1:
                sr2[b * L1 + t, b * L1 + t + 1] = 1.0
        for t in range(Tp):
            # time-major output rows (t*BT + b): LSTM/softmax slices become contiguous
            pe2[t * BT + b, b * L1 + 2 * t] = 1.0
            po2[t * BT + b, b * L1 + 2 * t + 1] = 1.0

    wo_pad = jnp.zeros((H, O_pad), f32).at[:, :O].set(params["wo"].astype(f32))
    bo_pad = jnp.zeros((1, O_pad), f32).at[:, :O].set(params["bo"].astype(f32))

    kernel = make_kernel(BT, L, H)

    def const2d(shape):
        return pl.BlockSpec(shape, lambda i: (0, 0))

    y_pad, attn_flat = pl.pallas_call(
        kernel,
        out_shape=(jax.ShapeDtypeStruct((B_pad, O_pad), f32),
                   jax.ShapeDtypeStruct((B_pad, Tp * H), f32)),
        grid_spec=pltpu.PrefetchScalarGridSpec(
            num_scalar_prefetch=0,
            grid=(nblk,),
            in_specs=[
                pl.BlockSpec((BT * L, 3 * C_in), lambda i: (i, 0)),   # x taps
                const2d((3 * C_in, _C1)), const2d((1, _C1)),          # conv1 W/b
                const2d((M2, M1)), const2d((M2, M1)),                 # pool1 even/odd selectors
                const2d((M2, M2)), const2d((M2, M2)),                 # conv2 shift matrices
                const2d((3 * _C1, _C2)), const2d((1, _C2)),           # conv2 W/b
                const2d((M3, M2)), const2d((M3, M2)),                 # pool2 selectors (time-major)
                const2d((_C2, H)), const2d((1, H)),                   # fc W^T / b
                const2d((H, 4 * H)), const2d((H, 4 * H)),             # LSTM W_ih^T / W_hh^T ([i,f,g,o])
                const2d((1, 4 * H)),                                  # LSTM b_ih + b_hh
                const2d((H, H)), const2d((1, H)),                     # attention W^T / b
                const2d((H, O_pad)), const2d((1, O_pad)),             # final W^T / b (lane-padded)
            ],
            out_specs=[
                pl.BlockSpec((BT, O_pad), lambda i: (i, 0)),
                pl.BlockSpec((BT, Tp * H), lambda i: (i, 0)),
            ],
            scratch_shapes=[
                pltpu.VMEM((M2, 3 * _C1), f32),    # conv2 tap-concat buffer
                pltpu.VMEM((M3, H), f32),          # LSTM outputs (time-major)
            ],
        ),
        compiler_params=pltpu.CompilerParams(dimension_semantics=("parallel",)),
    )(x2d, params["w1"], params["b1"],
      jnp.asarray(pe1), jnp.asarray(po1), jnp.asarray(sl2), jnp.asarray(sr2),
      params["w2"], params["b2"], jnp.asarray(pe2), jnp.asarray(po2),
      params["wfc"], params["bfc"],
      params["wih"], params["whh"], params["blstm"],
      params["wa"], params["ba"], wo_pad, bo_pad)

    y = y_pad[:B, :O]
    attn = attn_flat[:B, :].reshape(B, Tp, H)
    return y, attn


def init_params(key, input_size, hidden_size, output_size):
    # Deterministic synthetic weights (shapes follow the nn.Module __init__), laid out
    # pre-transposed / tap-fused for the kernel:
    #   w1[k*Cin + ci, co] = conv1.weight[co, ci, k]   (taps k=0,1,2 <-> x[t-1], x[t], x[t+1])
    #   w2[k*64  + ci, co] = conv2.weight[co, ci, k]
    #   wih/whh = lstm.weight_*.T with gate blocks [i|f|g|o] along columns; blstm = b_ih + b_hh
    ks = jax.random.split(key, 13)
    H = hidden_size

    def rnd(k, shape, scale=0.1):
        return (scale * jax.random.normal(k, shape)).astype(jnp.float32)

    return dict(
        w1=rnd(ks[0], (3 * input_size, _C1)),
        b1=rnd(ks[1], (1, _C1)),
        w2=rnd(ks[2], (3 * _C1, _C2)),
        b2=rnd(ks[3], (1, _C2)),
        wfc=rnd(ks[4], (_C2, H)),          # fc.weight.T
        bfc=rnd(ks[5], (1, H)),
        wih=rnd(ks[6], (H, 4 * H)),        # lstm.weight_ih_l0.T
        whh=rnd(ks[7], (H, 4 * H)),        # lstm.weight_hh_l0.T
        blstm=rnd(ks[8], (1, 4 * H)),      # b_ih + b_hh
        wa=rnd(ks[9], (H, H)),             # attention Linear weight.T
        ba=rnd(ks[10], (1, H)),
        wo=rnd(ks[11], (H, output_size)),  # final Linear weight.T
        bo=rnd(ks[12], (1, output_size)),
    )


if __name__ == "__main__":
    key = jax.random.PRNGKey(0)
    kx, kp = jax.random.split(key)

    B, L, C_in = 16, 16, 4     # batch, sequence length, input_size  (grid has 2 parallel steps)
    H, O = 32, 8               # hidden_size, output_size

    x = jax.random.normal(kx, (B, L, C_in), dtype=jnp.float32)
    params = init_params(kp, C_in, H, O)

    fwd = jax.jit(conv_lstm_attention)
    y, attn = fwd(x, params)
    jax.block_until_ready((y, attn))

    assert y.shape == (B, O), y.shape
    assert attn.shape == (B, L // 4, H), attn.shape
    assert bool(jnp.all(jnp.isfinite(y))) and bool(jnp.all(jnp.isfinite(attn)))
    print("KERNEL_OK")
</pallas_src>

<mosaic_0001>
module attributes {stable_mosaic.version = 11 : i64} {
  func.func @kernel(%arg0: i32, %arg1: memref<128x12xf32, #tpu.memory_space<vmem>>, %arg2: memref<12x64xf32, #tpu.memory_space<vmem>>, %arg3: memref<1x64xf32, #tpu.memory_space<vmem>>, %arg4: memref<64x128xf32, #tpu.memory_space<vmem>>, %arg5: memref<64x128xf32, #tpu.memory_space<vmem>>, %arg6: memref<64x64xf32, #tpu.memory_space<vmem>>, %arg7: memref<64x64xf32, #tpu.memory_space<vmem>>, %arg8: memref<192x128xf32, #tpu.memory_space<vmem>>, %arg9: memref<1x128xf32, #tpu.memory_space<vmem>>, %arg10: memref<32x64xf32, #tpu.memory_space<vmem>>, %arg11: memref<32x64xf32, #tpu.memory_space<vmem>>, %arg12: memref<128x32xf32, #tpu.memory_space<vmem>>, %arg13: memref<1x32xf32, #tpu.memory_space<vmem>>, %arg14: memref<32x128xf32, #tpu.memory_space<vmem>>, %arg15: memref<32x128xf32, #tpu.memory_space<vmem>>, %arg16: memref<1x128xf32, #tpu.memory_space<vmem>>, %arg17: memref<32x32xf32, #tpu.memory_space<vmem>>, %arg18: memref<1x32xf32, #tpu.memory_space<vmem>>, %arg19: memref<32x128xf32, #tpu.memory_space<vmem>>, %arg20: memref<1x128xf32, #tpu.memory_space<vmem>>, %arg21: memref<8x128xf32, #tpu.memory_space<vmem>>, %arg22: memref<8x128xf32, #tpu.memory_space<vmem>>, %arg23: memref<64x192xf32, #tpu.memory_space<vmem>>, %arg24: memref<32x32xf32, #tpu.memory_space<vmem>>) attributes {dimension_semantics = [#tpu.dimension_semantics<parallel>], iteration_bounds = array<i64: 2>, scalar_prefetch = 0 : i64, scratch_operands = 2 : i64, tpu.core_type = #tpu.core_type<tc>, window_params = [{transform_indices = @transform_0, window_bounds = array<i64: 128, 12>}, {pipeline_mode = #tpu.pipeline_mode<synchronous>, transform_indices = @transform_1, window_bounds = array<i64: 12, 64>}, {pipeline_mode = #tpu.pipeline_mode<synchronous>, transform_indices = @transform_2, window_bounds = array<i64: 1, 64>}, {pipeline_mode = #tpu.pipeline_mode<synchronous>, transform_indices = @transform_3, window_bounds = array<i64: 64, 128>}, {pipeline_mode = #tpu.pipeline_mode<synchronous>, transform_indices = @transform_4, window_bounds = array<i64: 64, 128>}, {pipeline_mode = #tpu.pipeline_mode<synchronous>, transform_indices = @transform_5, window_bounds = array<i64: 64, 64>}, {pipeline_mode = #tpu.pipeline_mode<synchronous>, transform_indices = @transform_6, window_bounds = array<i64: 64, 64>}, {pipeline_mode = #tpu.pipeline_mode<synchronous>, transform_indices = @transform_7, window_bounds = array<i64: 192, 128>}, {pipeline_mode = #tpu.pipeline_mode<synchronous>, transform_indices = @transform_8, window_bounds = array<i64: 1, 128>}, {pipeline_mode = #tpu.pipeline_mode<synchronous>, transform_indices = @transform_9, window_bounds = array<i64: 32, 64>}, {pipeline_mode = #tpu.pipeline_mode<synchronous>, transform_indices = @transform_10, window_bounds = array<i64: 32, 64>}, {pipeline_mode = #tpu.pipeline_mode<synchronous>, transform_indices = @transform_11, window_bounds = array<i64: 128, 32>}, {pipeline_mode = #tpu.pipeline_mode<synchronous>, transform_indices = @transform_12, window_bounds = array<i64: 1, 32>}, {pipeline_mode = #tpu.pipeline_mode<synchronous>, transform_indices = @transform_13, window_bounds = array<i64: 32, 128>}, {pipeline_mode = #tpu.pipeline_mode<synchronous>, transform_indices = @transform_14, window_bounds = array<i64: 32, 128>}, {pipeline_mode = #tpu.pipeline_mode<synchronous>, transform_indices = @transform_15, window_bounds = array<i64: 1, 128>}, {pipeline_mode = #tpu.pipeline_mode<synchronous>, transform_indices = @transform_16, window_bounds = array<i64: 32, 32>}, {pipeline_mode = #tpu.pipeline_mode<synchronous>, transform_indices = @transform_17, window_bounds = array<i64: 1, 32>}, {pipeline_mode = #tpu.pipeline_mode<synchronous>, transform_indices = @transform_18, window_bounds = array<i64: 32, 128>}, {pipeline_mode = #tpu.pipeline_mode<synchronous>, transform_indices = @transform_19, window_bounds = array<i64: 1, 128>}, {transform_indices = @transform_20, window_bounds = array<i64: 8, 128>}, {transform_indices = @transform_21, window_bounds = array<i64: 8, 128>}]} {
    %c0 = arith.constant 0 : index
    %c0_0 = arith.constant 0 : index
    %0 = vector.load %arg1[%c0, %c0_0] : memref<128x12xf32, #tpu.memory_space<vmem>>, vector<128x12xf32>
    %c0_1 = arith.constant 0 : index
    %c0_2 = arith.constant 0 : index
    %1 = vector.load %arg2[%c0_1, %c0_2] : memref<12x64xf32, #tpu.memory_space<vmem>>, vector<12x64xf32>
    %cst = arith.constant dense<0.000000e+00> : vector<128x64xf32>
    %2 = tpu.matmul %0, %1, %cst {dimension_numbers = #tpu.dot_dimension_numbers<[1], [0], [0], [1], [0, 0, 1, 1], [], []>} : vector<128x12xf32>, vector<12x64xf32>, vector<128x64xf32> -> vector<128x64xf32>
    %c0_3 = arith.constant 0 : index
    %c0_4 = arith.constant 0 : index
    %3 = vector.load %arg3[%c0_3, %c0_4] : memref<1x64xf32, #tpu.memory_space<vmem>>, vector<1x64xf32>
    %4 = vector.broadcast %3 : vector<1x64xf32> to vector<128x64xf32>
    %5 = arith.addf %2, %4 : vector<128x64xf32>
    %cst_5 = arith.constant 0.000000e+00 : f32
    %6 = vector.broadcast %cst_5 : f32 to vector<128x64xf32>
    %7 = arith.maximumf %5, %6 : vector<128x64xf32>
    %c0_6 = arith.constant 0 : index
    %c0_7 = arith.constant 0 : index
    %8 = vector.load %arg4[%c0_6, %c0_7] : memref<64x128xf32, #tpu.memory_space<vmem>>, vector<64x128xf32>
    %cst_8 = arith.constant dense<0.000000e+00> : vector<64x64xf32>
    %9 = tpu.matmul %8, %7, %cst_8 {dimension_numbers = #tpu.dot_dimension_numbers<[1], [0], [0], [1], [0, 0, 1, 1], [], []>} : vector<64x128xf32>, vector<128x64xf32>, vector<64x64xf32> -> vector<64x64xf32>
    %c0_9 = arith.constant 0 : index
    %c0_10 = arith.constant 0 : index
    %10 = vector.load %arg5[%c0_9, %c0_10] : memref<64x128xf32, #tpu.memory_space<vmem>>, vector<64x128xf32>
    %cst_11 = arith.constant dense<0.000000e+00> : vector<64x64xf32>
    %11 = tpu.matmul %10, %7, %cst_11 {dimension_numbers = #tpu.dot_dimension_numbers<[1], [0], [0], [1], [0, 0, 1, 1], [], []>} : vector<64x128xf32>, vector<128x64xf32>, vector<64x64xf32> -> vector<64x64xf32>
    %12 = arith.maximumf %9, %11 : vector<64x64xf32>
    %c0_12 = arith.constant 0 : index
    %c64 = arith.constant 64 : index
    %13 = vector.load %arg23[%c0_12, %c64] : memref<64x192xf32, #tpu.memory_space<vmem>>, vector<64x64xf32>
    tpu.vector_store %arg23[%c0_12, %c64], %12 {strides = array<i32>} : memref<64x192xf32, #tpu.memory_space<vmem>>, vector<64x64xf32>,
    %c0_13 = arith.constant 0 : index
    %c0_14 = arith.constant 0 : index
    %14 = vector.load %arg6[%c0_13, %c0_14] : memref<64x64xf32, #tpu.memory_space<vmem>>, vector<64x64xf32>
    %cst_15 = arith.constant dense<0.000000e+00> : vector<64x64xf32>
    %15 = tpu.matmul %14, %12, %cst_15 {dimension_numbers = #tpu.dot_dimension_numbers<[1], [0], [0], [1], [0, 0, 1, 1], [], []>} : vector<64x64xf32>, vector<64x64xf32>, vector<64x64xf32> -> vector<64x64xf32>
    %c0_16 = arith.constant 0 : index
    %c0_17 = arith.constant 0 : index
    %16 = vector.load %arg23[%c0_16, %c0_17] : memref<64x192xf32, #tpu.memory_space<vmem>>, vector<64x64xf32>
    tpu.vector_store %arg23[%c0_16, %c0_17], %15 {strides = array<i32>} : memref<64x192xf32, #tpu.memory_space<vmem>>, vector<64x64xf32>,
    %c0_18 = arith.constant 0 : index
    %c0_19 = arith.constant 0 : index
    %17 = vector.load %arg7[%c0_18, %c0_19] : memref<64x64xf32, #tpu.memory_space<vmem>>, vector<64x64xf32>
    %cst_20 = arith.constant dense<0.000000e+00> : vector<64x64xf32>
    %18 = tpu.matmul %17, %12, %cst_20 {dimension_numbers = #tpu.dot_dimension_numbers<[1], [0], [0], [1], [0, 0, 1, 1], [], []>} : vector<64x64xf32>, vector<64x64xf32>, vector<64x64xf32> -> vector<64x64xf32>
    %c0_21 = arith.constant 0 : index
    %c128 = arith.constant 128 : index
    %19 = vector.load %arg23[%c0_21, %c128] : memref<64x192xf32, #tpu.memory_space<vmem>>, vector<64x64xf32>
    tpu.vector_store %arg23[%c0_21, %c128], %18 {strides = array<i32>} : memref<64x192xf32, #tpu.memory_space<vmem>>, vector<64x64xf32>,
    %c0_22 = arith.constant 0 : index
    %c0_23 = arith.constant 0 : index
    %20 = vector.load %arg23[%c0_22, %c0_23] : memref<64x192xf32, #tpu.memory_space<vmem>>, vector<64x192xf32>
    %c0_24 = arith.constant 0 : index
    %c0_25 = arith.constant 0 : index
    %21 = vector.load %arg8[%c0_24, %c0_25] : memref<192x128xf32, #tpu.memory_space<vmem>>, vector<192x128xf32>
    %cst_26 = arith.constant dense<0.000000e+00> : vector<64x128xf32>
    %22 = tpu.matmul %20, %21, %cst_26 {dimension_numbers = #tpu.dot_dimension_numbers<[1], [0], [0], [1], [0, 0, 1, 1], [], []>} : vector<64x192xf32>, vector<192x128xf32>, vector<64x128xf32> -> vector<64x128xf32>
    %c0_27 = arith.constant 0 : index
    %c0_28 = arith.constant 0 : index
    %23 = vector.load %arg9[%c0_27, %c0_28] : memref<1x128xf32, #tpu.memory_space<vmem>>, vector<1x128xf32>
    %24 = vector.broadcast %23 : vector<1x128xf32> to vector<64x128xf32>
    %25 = arith.addf %22, %24 : vector<64x128xf32>
    %cst_29 = arith.constant 0.000000e+00 : f32
    %26 = vector.broadcast %cst_29 : f32 to vector<64x128xf32>
    %27 = arith.maximumf %25, %26 : vector<64x128xf32>
    %c0_30 = arith.constant 0 : index
    %c0_31 = arith.constant 0 : index
    %28 = vector.load %arg10[%c0_30, %c0_31] : memref<32x64xf32, #tpu.memory_space<vmem>>, vector<32x64xf32>
    %cst_32 = arith.constant dense<0.000000e+00> : vector<32x128xf32>
    %29 = tpu.matmul %28, %27, %cst_32 {dimension_numbers = #tpu.dot_dimension_numbers<[1], [0], [0], [1], [0, 0, 1, 1], [], []>} : vector<32x64xf32>, vector<64x128xf32>, vector<32x128xf32> -> vector<32x128xf32>
    %c0_33 = arith.constant 0 : index
    %c0_34 = arith.constant 0 : index
    %30 = vector.load %arg11[%c0_33, %c0_34] : memref<32x64xf32, #tpu.memory_space<vmem>>, vector<32x64xf32>
    %cst_35 = arith.constant dense<0.000000e+00> : vector<32x128xf32>
    %31 = tpu.matmul %30, %27, %cst_35 {dimension_numbers = #tpu.dot_dimension_numbers<[1], [0], [0], [1], [0, 0, 1, 1], [], []>} : vector<32x64xf32>, vector<64x128xf32>, vector<32x128xf32> -> vector<32x128xf32>
    %32 = arith.maximumf %29, %31 : vector<32x128xf32>
    %c0_36 = arith.constant 0 : index
    %c0_37 = arith.constant 0 : index
    %33 = vector.load %arg12[%c0_36, %c0_37] : memref<128x32xf32, #tpu.memory_space<vmem>>, vector<128x32xf32>
    %cst_38 = arith.constant dense<0.000000e+00> : vector<32x32xf32>
    %34 = tpu.matmul %32, %33, %cst_38 {dimension_numbers = #tpu.dot_dimension_numbers<[1], [0], [0], [1], [0, 0, 1, 1], [], []>} : vector<32x128xf32>, vector<128x32xf32>, vector<32x32xf32> -> vector<32x32xf32>
    %c0_39 = arith.constant 0 : index
    %c0_40 = arith.constant 0 : index
    %35 = vector.load %arg13[%c0_39, %c0_40] : memref<1x32xf32, #tpu.memory_space<vmem>>, vector<1x32xf32>
    %36 = vector.broadcast %35 : vector<1x32xf32> to vector<32x32xf32>
    %37 = arith.addf %34, %36 : vector<32x32xf32>
    %c0_41 = arith.constant 0 : index
    %c0_42 = arith.constant 0 : index
    %38 = vector.load %arg14[%c0_41, %c0_42] : memref<32x128xf32, #tpu.memory_space<vmem>>, vector<32x128xf32>
    %cst_43 = arith.constant dense<0.000000e+00> : vector<32x128xf32>
    %39 = tpu.matmul %37, %38, %cst_43 {dimension_numbers = #tpu.dot_dimension_numbers<[1], [0], [0], [1], [0, 0, 1, 1], [], []>} : vector<32x32xf32>, vector<32x128xf32>, vector<32x128xf32> -> vector<32x128xf32>
    %c0_44 = arith.constant 0 : index
    %c0_45 = arith.constant 0 : index
    %40 = vector.load %arg16[%c0_44, %c0_45] : memref<1x128xf32, #tpu.memory_space<vmem>>, vector<1x128xf32>
    %41 = vector.broadcast %40 : vector<1x128xf32> to vector<32x128xf32>
    %42 = arith.addf %39, %41 : vector<32x128xf32>
    %c0_46 = arith.constant 0 : index
    %c0_47 = arith.constant 0 : index
    %43 = vector.load %arg15[%c0_46, %c0_47] : memref<32x128xf32, #tpu.memory_space<vmem>>, vector<32x128xf32>
    %cst_48 = arith.constant 0.000000e+00 : f32
    %44 = vector.broadcast %cst_48 : f32 to vector<8x32xf32>
    %cst_49 = arith.constant 0.000000e+00 : f32
    %45 = vector.broadcast %cst_49 : f32 to vector<8x32xf32>
    %46 = vector.extract_strided_slice %42 {offsets = [0, 0], sizes = [8, 128], strides = [1, 1]} : vector<32x128xf32> to vector<8x128xf32>
    %cst_50 = arith.constant dense<0.000000e+00> : vector<8x128xf32>
    %47 = tpu.matmul %44, %43, %cst_50 {dimension_numbers = #tpu.dot_dimension_numbers<[1], [0], [0], [1], [0, 0, 1, 1], [], []>} : vector<8x32xf32>, vector<32x128xf32>, vector<8x128xf32> -> vector<8x128xf32>
    %48 = arith.addf %46, %47 : vector<8x128xf32>
    %49 = vector.extract_strided_slice %48 {offsets = [0, 0], sizes = [8, 32], strides = [1, 1]} : vector<8x128xf32> to vector<8x32xf32>
    %cst_51 = arith.constant 0.000000e+00 : f32
    %50 = vector.broadcast %cst_51 : f32 to vector<8x32xf32>
    %51 = arith.subf %50, %49 : vector<8x32xf32>
    %52 = math.exp %51 : vector<8x32xf32>
    %cst_52 = arith.constant 1.000000e+00 : f32
    %53 = vector.broadcast %cst_52 : f32 to vector<8x32xf32>
    %54 = arith.addf %53, %52 : vector<8x32xf32>
    %55 = tpu.reciprocal %54 {approx = true} : vector<8x32xf32> -> vector<8x32xf32>
    %56 = vector.extract_strided_slice %48 {offsets = [0, 32], sizes = [8, 32], strides = [1, 1]} : vector<8x128xf32> to vector<8x32xf32>
    %cst_53 = arith.constant 0.000000e+00 : f32
    %57 = vector.broadcast %cst_53 : f32 to vector<8x32xf32>
    %58 = arith.subf %57, %56 : vector<8x32xf32>
    %59 = math.exp %58 : vector<8x32xf32>
    %cst_54 = arith.constant 1.000000e+00 : f32
    %60 = vector.broadcast %cst_54 : f32 to vector<8x32xf32>
    %61 = arith.addf %60, %59 : vector<8x32xf32>
    %62 = tpu.reciprocal %61 {approx = true} : vector<8x32xf32> -> vector<8x32xf32>
    %63 = vector.extract_strided_slice %48 {offsets = [0, 64], sizes = [8, 32], strides = [1, 1]} : vector<8x128xf32> to vector<8x32xf32>
    %64 = math.tanh %63 : vector<8x32xf32>
    %65 = vector.extract_strided_slice %48 {offsets = [0, 96], sizes = [8, 32], strides = [1, 1]} : vector<8x128xf32> to vector<8x32xf32>
    %cst_55 = arith.constant 0.000000e+00 : f32
    %66 = vector.broadcast %cst_55 : f32 to vector<8x32xf32>
    %67 = arith.subf %66, %65 : vector<8x32xf32>
    %68 = math.exp %67 : vector<8x32xf32>
    %cst_56 = arith.constant 1.000000e+00 : f32
    %69 = vector.broadcast %cst_56 : f32 to vector<8x32xf32>
    %70 = arith.addf %69, %68 : vector<8x32xf32>
    %71 = tpu.reciprocal %70 {approx = true} : vector<8x32xf32> -> vector<8x32xf32>
    %72 = arith.mulf %62, %45 : vector<8x32xf32>
    %73 = arith.mulf %55, %64 : vector<8x32xf32>
    %74 = arith.addf %72, %73 : vector<8x32xf32>
    %75 = math.tanh %74 : vector<8x32xf32>
    %76 = arith.mulf %71, %75 : vector<8x32xf32>
    %c0_57 = arith.constant 0 : index
    %c0_58 = arith.constant 0 : index
    %77 = vector.load %arg24[%c0_57, %c0_58] : memref<32x32xf32, #tpu.memory_space<vmem>>, vector<8x32xf32>
    tpu.vector_store %arg24[%c0_57, %c0_58], %76 {strides = array<i32>} : memref<32x32xf32, #tpu.memory_space<vmem>>, vector<8x32xf32>,
    %78 = vector.extract_strided_slice %42 {offsets = [8, 0], sizes = [8, 128], strides = [1, 1]} : vector<32x128xf32> to vector<8x128xf32>
    %cst_59 = arith.constant dense<0.000000e+00> : vector<8x128xf32>
    %79 = tpu.matmul %76, %43, %cst_59 {dimension_numbers = #tpu.dot_dimension_numbers<[1], [0], [0], [1], [0, 0, 1, 1], [], []>} : vector<8x32xf32>, vector<32x128xf32>, vector<8x128xf32> -> vector<8x128xf32>
    %80 = arith.addf %78, %79 : vector<8x128xf32>
    %81 = vector.extract_strided_slice %80 {offsets = [0, 0], sizes = [8, 32], strides = [1, 1]} : vector<8x128xf32> to vector<8x32xf32>
    %cst_60 = arith.constant 0.000000e+00 : f32
    %82 = vector.broadcast %cst_60 : f32 to vector<8x32xf32>
    %83 = arith.subf %82, %81 : vector<8x32xf32>
    %84 = math.exp %83 : vector<8x32xf32>
    %cst_61 = arith.constant 1.000000e+00 : f32
    %85 = vector.broadcast %cst_61 : f32 to vector<8x32xf32>
    %86 = arith.addf %85, %84 : vector<8x32xf32>
    %87 = tpu.reciprocal %86 {approx = true} : vector<8x32xf32> -> vector<8x32xf32>
    %88 = vector.extract_strided_slice %80 {offsets = [0, 32], sizes = [8, 32], strides = [1, 1]} : vector<8x128xf32> to vector<8x32xf32>
    %cst_62 = arith.constant 0.000000e+00 : f32
    %89 = vector.broadcast %cst_62 : f32 to vector<8x32xf32>
    %90 = arith.subf %89, %88 : vector<8x32xf32>
    %91 = math.exp %90 : vector<8x32xf32>
    %cst_63 = arith.constant 1.000000e+00 : f32
    %92 = vector.broadcast %cst_63 : f32 to vector<8x32xf32>
    %93 = arith.addf %92, %91 : vector<8x32xf32>
    %94 = tpu.reciprocal %93 {approx = true} : vector<8x32xf32> -> vector<8x32xf32>
    %95 = vector.extract_strided_slice %80 {offsets = [0, 64], sizes = [8, 32], strides = [1, 1]} : vector<8x128xf32> to vector<8x32xf32>
    %96 = math.tanh %95 : vector<8x32xf32>
    %97 = vector.extract_strided_slice %80 {offsets = [0, 96], sizes = [8, 32], strides = [1, 1]} : vector<8x128xf32> to vector<8x32xf32>
    %cst_64 = arith.constant 0.000000e+00 : f32
    %98 = vector.broadcast %cst_64 : f32 to vector<8x32xf32>
    %99 = arith.subf %98, %97 : vector<8x32xf32>
    %100 = math.exp %99 : vector<8x32xf32>
    %cst_65 = arith.constant 1.000000e+00 : f32
    %101 = vector.broadcast %cst_65 : f32 to vector<8x32xf32>
    %102 = arith.addf %101, %100 : vector<8x32xf32>
    %103 = tpu.reciprocal %102 {approx = true} : vector<8x32xf32> -> vector<8x32xf32>
    %104 = arith.mulf %94, %74 : vector<8x32xf32>
    %105 = arith.mulf %87, %96 : vector<8x32xf32>
    %106 = arith.addf %104, %105 : vector<8x32xf32>
    %107 = math.tanh %106 : vector<8x32xf32>
    %108 = arith.mulf %103, %107 : vector<8x32xf32>
    %c8 = arith.constant 8 : index
    %c0_66 = arith.constant 0 : index
    %109 = vector.load %arg24[%c8, %c0_66] : memref<32x32xf32, #tpu.memory_space<vmem>>, vector<8x32xf32>
    tpu.vector_store %arg24[%c8, %c0_66], %108 {strides = array<i32>} : memref<32x32xf32, #tpu.memory_space<vmem>>, vector<8x32xf32>,
    %110 = vector.extract_strided_slice %42 {offsets = [16, 0], sizes = [8, 128], strides = [1, 1]} : vector<32x128xf32> to vector<8x128xf32>
    %cst_67 = arith.constant dense<0.000000e+00> : vector<8x128xf32>
    %111 = tpu.matmul %108, %43, %cst_67 {dimension_numbers = #tpu.dot_dimension_numbers<[1], [0], [0], [1], [0, 0, 1, 1], [], []>} : vector<8x32xf32>, vector<32x128xf32>, vector<8x128xf32> -> vector<8x128xf32>
    %112 = arith.addf %110, %111 : vector<8x128xf32>
    %113 = vector.extract_strided_slice %112 {offsets = [0, 0], sizes = [8, 32], strides = [1, 1]} : vector<8x128xf32> to vector<8x32xf32>
    %cst_68 = arith.constant 0.000000e+00 : f32
    %114 = vector.broadcast %cst_68 : f32 to vector<8x32xf32>
    %115 = arith.subf %114, %113 : vector<8x32xf32>
    %116 = math.exp %115 : vector<8x32xf32>
    %cst_69 = arith.constant 1.000000e+00 : f32
    %117 = vector.broadcast %cst_69 : f32 to vector<8x32xf32>
    %118 = arith.addf %117, %116 : vector<8x32xf32>
    %119 = tpu.reciprocal %118 {approx = true} : vector<8x32xf32> -> vector<8x32xf32>
    %120 = vector.extract_strided_slice %112 {offsets = [0, 32], sizes = [8, 32], strides = [1, 1]} : vector<8x128xf32> to vector<8x32xf32>
    %cst_70 = arith.constant 0.000000e+00 : f32
    %121 = vector.broadcast %cst_70 : f32 to vector<8x32xf32>
    %122 = arith.subf %121, %120 : vector<8x32xf32>
    %123 = math.exp %122 : vector<8x32xf32>
    %cst_71 = arith.constant 1.000000e+00 : f32
    %124 = vector.broadcast %cst_71 : f32 to vector<8x32xf32>
    %125 = arith.addf %124, %123 : vector<8x32xf32>
    %126 = tpu.reciprocal %125 {approx = true} : vector<8x32xf32> -> vector<8x32xf32>
    %127 = vector.extract_strided_slice %112 {offsets = [0, 64], sizes = [8, 32], strides = [1, 1]} : vector<8x128xf32> to vector<8x32xf32>
    %128 = math.tanh %127 : vector<8x32xf32>
    %129 = vector.extract_strided_slice %112 {offsets = [0, 96], sizes = [8, 32], strides = [1, 1]} : vector<8x128xf32> to vector<8x32xf32>
    %cst_72 = arith.constant 0.000000e+00 : f32
    %130 = vector.broadcast %cst_72 : f32 to vector<8x32xf32>
    %131 = arith.subf %130, %129 : vector<8x32xf32>
    %132 = math.exp %131 : vector<8x32xf32>
    %cst_73 = arith.constant 1.000000e+00 : f32
    %133 = vector.broadcast %cst_73 : f32 to vector<8x32xf32>
    %134 = arith.addf %133, %132 : vector<8x32xf32>
    %135 = tpu.reciprocal %134 {approx = true} : vector<8x32xf32> -> vector<8x32xf32>
    %136 = arith.mulf %126, %106 : vector<8x32xf32>
    %137 = arith.mulf %119, %128 : vector<8x32xf32>
    %138 = arith.addf %136, %137 : vector<8x32xf32>
    %139 = math.tanh %138 : vector<8x32xf32>
    %140 = arith.mulf %135, %139 : vector<8x32xf32>
    %c16 = arith.constant 16 : index
    %c0_74 = arith.constant 0 : index
    %141 = vector.load %arg24[%c16, %c0_74] : memref<32x32xf32, #tpu.memory_space<vmem>>, vector<8x32xf32>
    tpu.vector_store %arg24[%c16, %c0_74], %140 {strides = array<i32>} : memref<32x32xf32, #tpu.memory_space<vmem>>, vector<8x32xf32>,
    %142 = vector.extract_strided_slice %42 {offsets = [24, 0], sizes = [8, 128], strides = [1, 1]} : vector<32x128xf32> to vector<8x128xf32>
    %cst_75 = arith.constant dense<0.000000e+00> : vector<8x128xf32>
    %143 = tpu.matmul %140, %43, %cst_75 {dimension_numbers = #tpu.dot_dimension_numbers<[1], [0], [0], [1], [0, 0, 1, 1], [], []>} : vector<8x32xf32>, vector<32x128xf32>, vector<8x128xf32> -> vector<8x128xf32>
    %144 = arith.addf %142, %143 : vector<8x128xf32>
    %145 = vector.extract_strided_slice %144 {offsets = [0, 0], sizes = [8, 32], strides = [1, 1]} : vector<8x128xf32> to vector<8x32xf32>
    %cst_76 = arith.constant 0.000000e+00 : f32
    %146 = vector.broadcast %cst_76 : f32 to vector<8x32xf32>
    %147 = arith.subf %146, %145 : vector<8x32xf32>
    %148 = math.exp %147 : vector<8x32xf32>
    %cst_77 = arith.constant 1.000000e+00 : f32
    %149 = vector.broadcast %cst_77 : f32 to vector<8x32xf32>
    %150 = arith.addf %149, %148 : vector<8x32xf32>
    %151 = tpu.reciprocal %150 {approx = true} : vector<8x32xf32> -> vector<8x32xf32>
    %152 = vector.extract_strided_slice %144 {offsets = [0, 32], sizes = [8, 32], strides = [1, 1]} : vector<8x128xf32> to vector<8x32xf32>
    %cst_78 = arith.constant 0.000000e+00 : f32
    %153 = vector.broadcast %cst_78 : f32 to vector<8x32xf32>
    %154 = arith.subf %153, %152 : vector<8x32xf32>
    %155 = math.exp %154 : vector<8x32xf32>
    %cst_79 = arith.constant 1.000000e+00 : f32
    %156 = vector.broadcast %cst_79 : f32 to vector<8x32xf32>
    %157 = arith.addf %156, %155 : vector<8x32xf32>
    %158 = tpu.reciprocal %157 {approx = true} : vector<8x32xf32> -> vector<8x32xf32>
    %159 = vector.extract_strided_slice %144 {offsets = [0, 64], sizes = [8, 32], strides = [1, 1]} : vector<8x128xf32> to vector<8x32xf32>
    %160 = math.tanh %159 : vector<8x32xf32>
    %161 = vector.extract_strided_slice %144 {offsets = [0, 96], sizes = [8, 32], strides = [1, 1]} : vector<8x128xf32> to vector<8x32xf32>
    %cst_80 = arith.constant 0.000000e+00 : f32
    %162 = vector.broadcast %cst_80 : f32 to vector<8x32xf32>
    %163 = arith.subf %162, %161 : vector<8x32xf32>
    %164 = math.exp %163 : vector<8x32xf32>
    %cst_81 = arith.constant 1.000000e+00 : f32
    %165 = vector.broadcast %cst_81 : f32 to vector<8x32xf32>
    %166 = arith.addf %165, %164 : vector<8x32xf32>
    %167 = tpu.reciprocal %166 {approx = true} : vector<8x32xf32> -> vector<8x32xf32>
    %168 = arith.mulf %158, %138 : vector<8x32xf32>
    %169 = arith.mulf %151, %160 : vector<8x32xf32>
    %170 = arith.addf %168, %169 : vector<8x32xf32>
    %171 = math.tanh %170 : vector<8x32xf32>
    %172 = arith.mulf %167, %171 : vector<8x32xf32>
    %c24 = arith.constant 24 : index
    %c0_82 = arith.constant 0 : index
    %173 = vector.load %arg24[%c24, %c0_82] : memref<32x32xf32, #tpu.memory_space<vmem>>, vector<8x32xf32>
    tpu.vector_store %arg24[%c24, %c0_82], %172 {strides = array<i32>} : memref<32x32xf32, #tpu.memory_space<vmem>>, vector<8x32xf32>,
    %c0_83 = arith.constant 0 : index
    %c0_84 = arith.constant 0 : index
    %174 = vector.load %arg24[%c0_83, %c0_84] : memref<32x32xf32, #tpu.memory_space<vmem>>, vector<32x32xf32>
    %c0_85 = arith.constant 0 : index
    %c0_86 = arith.constant 0 : index
    %175 = vector.load %arg17[%c0_85, %c0_86] : memref<32x32xf32, #tpu.memory_space<vmem>>, vector<32x32xf32>
    %cst_87 = arith.constant dense<0.000000e+00> : vector<32x32xf32>
    %176 = tpu.matmul %174, %175, %cst_87 {dimension_numbers = #tpu.dot_dimension_numbers<[1], [0], [0], [1], [0, 0, 1, 1], [], []>} : vector<32x32xf32>, vector<32x32xf32>, vector<32x32xf32> -> vector<32x32xf32>
    %c0_88 = arith.constant 0 : index
    %c0_89 = arith.constant 0 : index
    %177 = vector.load %arg18[%c0_88, %c0_89] : memref<1x32xf32, #tpu.memory_space<vmem>>, vector<1x32xf32>
    %178 = vector.broadcast %177 : vector<1x32xf32> to vector<32x32xf32>
    %179 = arith.addf %176, %178 : vector<32x32xf32>
    %180 = vector.extract_strided_slice %179 {offsets = [0, 0], sizes = [8, 32], strides = [1, 1]} : vector<32x32xf32> to vector<8x32xf32>
    %181 = vector.extract_strided_slice %179 {offsets = [8, 0], sizes = [8, 32], strides = [1, 1]} : vector<32x32xf32> to vector<8x32xf32>
    %182 = vector.extract_strided_slice %179 {offsets = [16, 0], sizes = [8, 32], strides = [1, 1]} : vector<32x32xf32> to vector<8x32xf32>
    %183 = vector.extract_strided_slice %179 {offsets = [24, 0], sizes = [8, 32], strides = [1, 1]} : vector<32x32xf32> to vector<8x32xf32>
    %184 = arith.maximumf %180, %181 : vector<8x32xf32>
    %185 = arith.maximumf %184, %182 : vector<8x32xf32>
    %186 = arith.maximumf %185, %183 : vector<8x32xf32>
    %187 = arith.subf %180, %186 : vector<8x32xf32>
    %188 = math.exp %187 : vector<8x32xf32>
    %189 = arith.subf %181, %186 : vector<8x32xf32>
    %190 = math.exp %189 : vector<8x32xf32>
    %191 = arith.subf %182, %186 : vector<8x32xf32>
    %192 = math.exp %191 : vector<8x32xf32>
    %193 = arith.subf %183, %186 : vector<8x32xf32>
    %194 = math.exp %193 : vector<8x32xf32>
    %195 = arith.addf %188, %190 : vector<8x32xf32>
    %196 = arith.addf %195, %192 : vector<8x32xf32>
    %197 = arith.addf %196, %194 : vector<8x32xf32>
    %198 = tpu.reciprocal %197 {approx = true} : vector<8x32xf32> -> vector<8x32xf32>
    %cst_90 = arith.constant 0.000000e+00 : f32
    %199 = vector.broadcast %cst_90 : f32 to vector<8x32xf32>
    %200 = arith.mulf %188, %198 : vector<8x32xf32>
    %c0_91 = arith.constant 0 : index
    %c0_92 = arith.constant 0 : index
    %201 = vector.load %arg22[%c0_91, %c0_92] : memref<8x128xf32, #tpu.memory_space<vmem>>, vector<8x32xf32>
    tpu.vector_store %arg22[%c0_91, %c0_92], %200 {strides = array<i32>} : memref<8x128xf32, #tpu.memory_space<vmem>>, vector<8x32xf32>,
    %202 = vector.extract_strided_slice %174 {offsets = [0, 0], sizes = [8, 32], strides = [1, 1]} : vector<32x32xf32> to vector<8x32xf32>
    %203 = arith.mulf %200, %202 : vector<8x32xf32>
    %204 = arith.addf %199, %203 : vector<8x32xf32>
    %205 = arith.mulf %190, %198 : vector<8x32xf32>
    %c0_93 = arith.constant 0 : index
    %c32 = arith.constant 32 : index
    %206 = vector.load %arg22[%c0_93, %c32] : memref<8x128xf32, #tpu.memory_space<vmem>>, vector<8x32xf32>
    tpu.vector_store %arg22[%c0_93, %c32], %205 {strides = array<i32>} : memref<8x128xf32, #tpu.memory_space<vmem>>, vector<8x32xf32>,
    %207 = vector.extract_strided_slice %174 {offsets = [8, 0], sizes = [8, 32], strides = [1, 1]} : vector<32x32xf32> to vector<8x32xf32>
    %208 = arith.mulf %205, %207 : vector<8x32xf32>
    %209 = arith.addf %204, %208 : vector<8x32xf32>
    %210 = arith.mulf %192, %198 : vector<8x32xf32>
    %c0_94 = arith.constant 0 : index
    %c64_95 = arith.constant 64 : index
    %211 = vector.load %arg22[%c0_94, %c64_95] : memref<8x128xf32, #tpu.memory_space<vmem>>, vector<8x32xf32>
    tpu.vector_store %arg22[%c0_94, %c64_95], %210 {strides = array<i32>} : memref<8x128xf32, #tpu.memory_space<vmem>>, vector<8x32xf32>,
    %212 = vector.extract_strided_slice %174 {offsets = [16, 0], sizes = [8, 32], strides = [1, 1]} : vector<32x32xf32> to vector<8x32xf32>
    %213 = arith.mulf %210, %212 : vector<8x32xf32>
    %214 = arith.addf %209, %213 : vector<8x32xf32>
    %215 = arith.mulf %194, %198 : vector<8x32xf32>
    %c0_96 = arith.constant 0 : index
    %c96 = arith.constant 96 : index
    %216 = vector.load %arg22[%c0_96, %c96] : memref<8x128xf32, #tpu.memory_space<vmem>>, vector<8x32xf32>
    tpu.vector_store %arg22[%c0_96, %c96], %215 {strides = array<i32>} : memref<8x128xf32, #tpu.memory_space<vmem>>, vector<8x32xf32>,
    %217 = vector.extract_strided_slice %174 {offsets = [24, 0], sizes = [8, 32], strides = [1, 1]} : vector<32x32xf32> to vector<8x32xf32>
    %218 = arith.mulf %215, %217 : vector<8x32xf32>
    %219 = arith.addf %214, %218 : vector<8x32xf32>
    %c0_97 = arith.constant 0 : index
    %c0_98 = arith.constant 0 : index
    %220 = vector.load %arg19[%c0_97, %c0_98] : memref<32x128xf32, #tpu.memory_space<vmem>>, vector<32x128xf32>
    %cst_99 = arith.constant dense<0.000000e+00> : vector<8x128xf32>
    %221 = tpu.matmul %219, %220, %cst_99 {dimension_numbers = #tpu.dot_dimension_numbers<[1], [0], [0], [1], [0, 0, 1, 1], [], []>} : vector<8x32xf32>, vector<32x128xf32>, vector<8x128xf32> -> vector<8x128xf32>
    %c0_100 = arith.constant 0 : index
    %c0_101 = arith.constant 0 : index
    %222 = vector.load %arg20[%c0_100, %c0_101] : memref<1x128xf32, #tpu.memory_space<vmem>>, vector<1x128xf32>
    %223 = vector.broadcast %222 : vector<1x128xf32> to vector<8x128xf32>
    %224 = arith.addf %221, %223 : vector<8x128xf32>
    %c0_102 = arith.constant 0 : index
    %c0_103 = arith.constant 0 : index
    %225 = vector.load %arg21[%c0_102, %c0_103] : memref<8x128xf32, #tpu.memory_space<vmem>>, vector<8x128xf32>
    tpu.vector_store %arg21[%c0_102, %c0_103], %224 {strides = array<i32>} : memref<8x128xf32, #tpu.memory_space<vmem>>, vector<8x128xf32>,
    return
  }
  func.func @transform_0(%arg0: i32) -> (i32, i32) {
    %c0_i32 = arith.constant 0 : i32
    %c0_i32_0 = arith.constant 0 : i32
    return %arg0, %c0_i32 : i32, i32
  }
  func.func @transform_1(%arg0: i32) -> (i32, i32) {
    %c0_i32 = arith.constant 0 : i32
    %c0_i32_0 = arith.constant 0 : i32
    %c0_i32_1 = arith.constant 0 : i32
    return %c0_i32, %c0_i32_0 : i32, i32
  }
  func.func @transform_2(%arg0: i32) -> (i32, i32) {
    %c0_i32 = arith.constant 0 : i32
    %c0_i32_0 = arith.constant 0 : i32
    %c0_i32_1 = arith.constant 0 : i32
    return %c0_i32, %c0_i32_0 : i32, i32
  }
  func.func @transform_3(%arg0: i32) -> (i32, i32) {
    %c0_i32 = arith.constant 0 : i32
    %c0_i32_0 = arith.constant 0 : i32
    %c0_i32_1 = arith.constant 0 : i32
    return %c0_i32, %c0_i32_0 : i32, i32
  }
  func.func @transform_4(%arg0: i32) -> (i32, i32) {
    %c0_i32 = arith.constant 0 : i32
    %c0_i32_0 = arith.constant 0 : i32
    %c0_i32_1 = arith.constant 0 : i32
    return %c0_i32, %c0_i32_0 : i32, i32
  }
  func.func @transform_5(%arg0: i32) -> (i32, i32) {
    %c0_i32 = arith.constant 0 : i32
    %c0_i32_0 = arith.constant 0 : i32
    %c0_i32_1 = arith.constant 0 : i32
    return %c0_i32, %c0_i32_0 : i32, i32
  }
  func.func @transform_6(%arg0: i32) -> (i32, i32) {
    %c0_i32 = arith.constant 0 : i32
    %c0_i32_0 = arith.constant 0 : i32
    %c0_i32_1 = arith.constant 0 : i32
    return %c0_i32, %c0_i32_0 : i32, i32
  }
  func.func @transform_7(%arg0: i32) -> (i32, i32) {
    %c0_i32 = arith.constant 0 : i32
    %c0_i32_0 = arith.constant 0 : i32
    %c0_i32_1 = arith.constant 0 : i32
    return %c0_i32, %c0_i32_0 : i32, i32
  }
  func.func @transform_8(%arg0: i32) -> (i32, i32) {
    %c0_i32 = arith.constant 0 : i32
    %c0_i32_0 = arith.constant 0 : i32
    %c0_i32_1 = arith.constant 0 : i32
    return %c0_i32, %c0_i32_0 : i32, i32
  }
  func.func @transform_9(%arg0: i32) -> (i32, i32) {
    %c0_i32 = arith.constant 0 : i32
    %c0_i32_0 = arith.constant 0 : i32
    %c0_i32_1 = arith.constant 0 : i32
    return %c0_i32, %c0_i32_0 : i32, i32
  }
  func.func @transform_10(%arg0: i32) -> (i32, i32) {
    %c0_i32 = arith.constant 0 : i32
    %c0_i32_0 = arith.constant 0 : i32
    %c0_i32_1 = arith.constant 0 : i32
    return %c0_i32, %c0_i32_0 : i32, i32
  }
  func.func @transform_11(%arg0: i32) -> (i32, i32) {
    %c0_i32 = arith.constant 0 : i32
    %c0_i32_0 = arith.constant 0 : i32
    %c0_i32_1 = arith.constant 0 : i32
    return %c0_i32, %c0_i32_0 : i32, i32
  }
  func.func @transform_12(%arg0: i32) -> (i32, i32) {
    %c0_i32 = arith.constant 0 : i32
    %c0_i32_0 = arith.constant 0 : i32
    %c0_i32_1 = arith.constant 0 : i32
    return %c0_i32, %c0_i32_0 : i32, i32
  }
  func.func @transform_13(%arg0: i32) -> (i32, i32) {
    %c0_i32 = arith.constant 0 : i32
    %c0_i32_0 = arith.constant 0 : i32
    %c0_i32_1 = arith.constant 0 : i32
    return %c0_i32, %c0_i32_0 : i32, i32
  }
  func.func @transform_14(%arg0: i32) -> (i32, i32) {
    %c0_i32 = arith.constant 0 : i32
    %c0_i32_0 = arith.constant 0 : i32
    %c0_i32_1 = arith.constant 0 : i32
    return %c0_i32, %c0_i32_0 : i32, i32
  }
  func.func @transform_15(%arg0: i32) -> (i32, i32) {
    %c0_i32 = arith.constant 0 : i32
    %c0_i32_0 = arith.constant 0 : i32
    %c0_i32_1 = arith.constant 0 : i32
    return %c0_i32, %c0_i32_0 : i32, i32
  }
  func.func @transform_16(%arg0: i32) -> (i32, i32) {
    %c0_i32 = arith.constant 0 : i32
    %c0_i32_0 = arith.constant 0 : i32
    %c0_i32_1 = arith.constant 0 : i32
    return %c0_i32, %c0_i32_0 : i32, i32
  }
  func.func @transform_17(%arg0: i32) -> (i32, i32) {
    %c0_i32 = arith.constant 0 : i32
    %c0_i32_0 = arith.constant 0 : i32
    %c0_i32_1 = arith.constant 0 : i32
    return %c0_i32, %c0_i32_0 : i32, i32
  }
  func.func @transform_18(%arg0: i32) -> (i32, i32) {
    %c0_i32 = arith.constant 0 : i32
    %c0_i32_0 = arith.constant 0 : i32
    %c0_i32_1 = arith.constant 0 : i32
    return %c0_i32, %c0_i32_0 : i32, i32
  }
  func.func @transform_19(%arg0: i32) -> (i32, i32) {
    %c0_i32 = arith.constant 0 : i32
    %c0_i32_0 = arith.constant 0 : i32
    %c0_i32_1 = arith.constant 0 : i32
    return %c0_i32, %c0_i32_0 : i32, i32
  }
  func.func @transform_20(%arg0: i32) -> (i32, i32) {
    %c0_i32 = arith.constant 0 : i32
    %c0_i32_0 = arith.constant 0 : i32
    return %arg0, %c0_i32 : i32, i32
  }
  func.func @transform_21(%arg0: i32) -> (i32, i32) {
    %c0_i32 = arith.constant 0 : i32
    %c0_i32_0 = arith.constant 0 : i32
    return %arg0, %c0_i32 : i32, i32
  }
}

</mosaic_0001>

<llo_original>
// kernel: conv_lstm_attention.1
$region0: #{conv_lstm_attention.1}
  #allocation0 [shape = 'u32[]', space=smem, size = 0x4, offset = 0x4, fixed_abs, tag = 'smem constant byte address 0x4 - core index']
  #allocation1 [shape = 'u32[72,128]{1,0:T(1,128)}', space=vmem, size = 0x9000, scoped, tag = 'internal scratch']
  #allocation2 [shape = 'f32[64,192]{1,0:T(8,128)}', space=vmem, size = 0x10000, scoped, tag = 'scratch operand']
  #allocation3 [shape = 'f32[32,32]{1,0:T(8,128)}', space=vmem, size = 0x4000, scoped, tag = 'scratch operand']
  %s0 = inlined_call_operand.vmem [shape: f32[256,12], index: 0, kind: input, shape index: {}]
  %s1 = inlined_call_operand.vmem [shape: f32[12,64], index: 1, kind: input, shape index: {}]
  %s2 = inlined_call_operand.vmem [shape: f32[1,64], index: 2, kind: input, shape index: {}]
  %s3 = inlined_call_operand.vmem [shape: f32[64,128], index: 3, kind: input, shape index: {}]
  %s4 = inlined_call_operand.vmem [shape: f32[64,128], index: 4, kind: input, shape index: {}]
  %s5 = inlined_call_operand.vmem [shape: f32[64,64], index: 5, kind: input, shape index: {}]
  %s6 = inlined_call_operand.vmem [shape: f32[64,64], index: 6, kind: input, shape index: {}]
  %s7 = inlined_call_operand.vmem [shape: f32[192,128], index: 7, kind: input, shape index: {}]
  %s8 = inlined_call_operand.vmem [shape: f32[1,128], index: 8, kind: input, shape index: {}]
  %s9 = inlined_call_operand.vmem [shape: f32[32,64], index: 9, kind: input, shape index: {}]
  %s10 = inlined_call_operand.vmem [shape: f32[32,64], index: 10, kind: input, shape index: {}]
  %s11 = inlined_call_operand.vmem [shape: f32[128,32], index: 11, kind: input, shape index: {}]
  %s12 = inlined_call_operand.vmem [shape: f32[1,32], index: 12, kind: input, shape index: {}]
  %s13 = inlined_call_operand.vmem [shape: f32[32,128], index: 13, kind: input, shape index: {}]
  %s14 = inlined_call_operand.vmem [shape: f32[32,128], index: 14, kind: input, shape index: {}]
  %s15 = inlined_call_operand.vmem [shape: f32[1,128], index: 15, kind: input, shape index: {}]
  %s16 = inlined_call_operand.vmem [shape: f32[32,32], index: 16, kind: input, shape index: {}]
  %s17 = inlined_call_operand.vmem [shape: f32[1,32], index: 17, kind: input, shape index: {}]
  %s18 = inlined_call_operand.vmem [shape: f32[32,128], index: 18, kind: input, shape index: {}]
  %s19 = inlined_call_operand.vmem [shape: f32[1,128], index: 19, kind: input, shape index: {}]
  %s20 = inlined_call_operand.vmem [shape: f32[16,128], index: 20, kind: output, shape index: {0}]
  %s21 = inlined_call_operand.vmem [shape: f32[16,128], index: 21, kind: output, shape index: {1}]
  %22 = xla_tuple %s20, %s21
  %s23 = sld [smem:[#allocation0]]
  $region121: #{conv_lstm_attention.1} parent=0
    _
  %s25 = ssub.s32 1, %s23
  %s26 = scalar_select 0, %s25, %s23
  loop: start=0, step=1, limit=4
  $region2: #{conv_lstm_attention.1} parent=0 // loop_pre_header
    _
  $region3: #{conv_lstm_attention.1} parent=0 // loop_header
    %s28 = sphi 0, %s32
    %p29 = scmp.ge.s32.totalorder %s28, 4
    %s38 = sphi 0, %s40
    %s41 = sphi 0, %s38
    %s42 = sphi 0, %s41
    %s58 = sphi 0, %s42
    %s62 = sphi 0, %s62
    %s64 = sphi 0, %s62
    %s65 = sphi 0, %s64
    %s79 = sphi 0, %s65
    %s83 = sphi 0, %s83
    %s85 = sphi 0, %s83
    %s86 = sphi 0, %s85
    %s100 = sphi 0, %s86
    %s104 = sphi 0, %s104
    %s106 = sphi 0, %s104
    %s107 = sphi 0, %s106
    %s121 = sphi 0, %s107
    %s125 = sphi 0, %s125
    %s127 = sphi 0, %s125
    %s128 = sphi 0, %s127
    %s142 = sphi 0, %s128
    %s146 = sphi 0, %s146
    %s148 = sphi 0, %s146
    %s149 = sphi 0, %s148
    %s163 = sphi 0, %s149
    %s167 = sphi 0, %s167
    %s169 = sphi 0, %s167
    %s170 = sphi 0, %s169
    %s184 = sphi 0, %s170
    %s188 = sphi 0, %s188
    %s190 = sphi 0, %s188
    %s191 = sphi 0, %s190
    %s205 = sphi 0, %s191
    %s209 = sphi 0, %s209
    %s211 = sphi 0, %s209
    %s212 = sphi 0, %s211
    %s226 = sphi 0, %s212
    %s230 = sphi 0, %s230
    %s232 = sphi 0, %s230
    %s233 = sphi 0, %s232
    %s247 = sphi 0, %s233
    %s251 = sphi 0, %s251
    %s253 = sphi 0, %s251
    %s254 = sphi 0, %s253
    %s268 = sphi 0, %s254
    %s272 = sphi 0, %s272
    %s274 = sphi 0, %s272
    %s275 = sphi 0, %s274
    %s289 = sphi 0, %s275
    %s293 = sphi 0, %s293
    %s295 = sphi 0, %s293
    %s296 = sphi 0, %s295
    %s310 = sphi 0, %s296
    %s314 = sphi 0, %s314
    %s316 = sphi 0, %s314
    %s317 = sphi 0, %s316
    %s331 = sphi 0, %s317
    %s335 = sphi 0, %s335
    %s337 = sphi 0, %s335
    %s338 = sphi 0, %s337
    %s352 = sphi 0, %s338
    %s356 = sphi 0, %s356
    %s358 = sphi 0, %s356
    %s359 = sphi 0, %s358
    %s373 = sphi 0, %s359
    %s377 = sphi 0, %s377
    %s379 = sphi 0, %s377
    %s380 = sphi 0, %s379
    %s394 = sphi 0, %s380
    %s398 = sphi 0, %s398
    %s400 = sphi 0, %s398
    %s401 = sphi 0, %s400
    %s415 = sphi 0, %s401
    %s419 = sphi 0, %s419
    %s421 = sphi 0, %s419
    %s422 = sphi 0, %s421
    %s436 = sphi 0, %s422
    %s440 = sphi 0, %s440
    %s442 = sphi 0, %s440
    %s443 = sphi 0, %s442
    %s457 = sphi 0, %s443
    %s463 = sphi 0, %s465
    %s466 = sphi 0, %s463
    %s467 = sphi 0, %s466
    %s483 = sphi 0, %s467
    %s489 = sphi 0, %s491
    %s492 = sphi 0, %s489
    %s493 = sphi 0, %s492
    %s509 = sphi 0, %s493
  $region4: #{conv_lstm_attention.1} parent=0 // loop_header_branch
    %31 = sbr.rel (%p29) target = $region8
  $region5: #{conv_lstm_attention.1} parent=0 // loop_body
    %s33 = ssub.s32 %s28, 1
    %s34 = ssub.s32 %s28, 2
    %s35 = sadd.s32 %s28, 1
    %s36 = ssub.s32 %s28, %s35
    %p37 = scmp.eq.s32.totalorder %s36, 0
    %s39 = sadd.s32 %s38, 1
    %s40 = scalar_select %p37, %s38, %s39
    %p43 = pneg %p37
    %p44 = scmp.eq.s32.totalorder %s28, 1
    %p45 = por %p43, %p44
    %p46 = scmp.ne.s32.totalorder %s38, %s41
    %p47 = scmp.eq.s32.totalorder %s28, 0
    %p48 = por %p46, %p47
    %p49 = scmp.ne.s32.totalorder %s38, %s41
    %p50 = scmp.eq.s32.totalorder %s33, 1
    %p51 = por %p49, %p50
    %p52 = scmp.ne.s32.totalorder %s41, %s42
    %p53 = scmp.eq.s32.totalorder %s33, 0
    %p54 = por %p52, %p53
    %p55 = scmp.ne.s32.totalorder %s41, %s42
    %p56 = scmp.eq.s32.totalorder %s34, 1
    %p57 = por %p55, %p56
    %p59 = scmp.ne.s32.totalorder %s42, %s58
    %p60 = scmp.eq.s32.totalorder %s34, 0
    %p61 = por %p59, %p60
    %s63 = sadd.s32 %s62, 1
    %p66 = scmp.eq.s32.totalorder %s28, 1
    %p67 = scmp.ne.s32.totalorder %s62, %s64
    %p68 = scmp.eq.s32.totalorder %s28, 0
    %p69 = por %p67, %p68
    %p70 = scmp.ne.s32.totalorder %s62, %s64
    %p71 = scmp.eq.s32.totalorder %s33, 1
    %p72 = por %p70, %p71
    %p73 = scmp.ne.s32.totalorder %s64, %s65
    %p74 = scmp.eq.s32.totalorder %s33, 0
    %p75 = por %p73, %p74
    %p76 = scmp.ne.s32.totalorder %s64, %s65
    %p77 = scmp.eq.s32.totalorder %s34, 1
    %p78 = por %p76, %p77
    %p80 = scmp.ne.s32.totalorder %s65, %s79
    %p81 = scmp.eq.s32.totalorder %s34, 0
    %p82 = por %p80, %p81
    %s84 = sadd.s32 %s83, 1
    %p87 = scmp.eq.s32.totalorder %s28, 1
    %p88 = scmp.ne.s32.totalorder %s83, %s85
    %p89 = scmp.eq.s32.totalorder %s28, 0
    %p90 = por %p88, %p89
    %p91 = scmp.ne.s32.totalorder %s83, %s85
    %p92 = scmp.eq.s32.totalorder %s33, 1
    %p93 = por %p91, %p92
    %p94 = scmp.ne.s32.totalorder %s85, %s86
    %p95 = scmp.eq.s32.totalorder %s33, 0
    %p96 = por %p94, %p95
    %p97 = scmp.ne.s32.totalorder %s85, %s86
    %p98 = scmp.eq.s32.totalorder %s34, 1
    %p99 = por %p97, %p98
    %p101 = scmp.ne.s32.totalorder %s86, %s100
    %p102 = scmp.eq.s32.totalorder %s34, 0
    %p103 = por %p101, %p102
    %s105 = sadd.s32 %s104, 1
    %p108 = scmp.eq.s32.totalorder %s28, 1
    %p109 = scmp.ne.s32.totalorder %s104, %s106
    %p110 = scmp.eq.s32.totalorder %s28, 0
    %p111 = por %p109, %p110
    %p112 = scmp.ne.s32.totalorder %s104, %s106
    %p113 = scmp.eq.s32.totalorder %s33, 1
    %p114 = por %p112, %p113
    %p115 = scmp.ne.s32.totalorder %s106, %s107
    %p116 = scmp.eq.s32.totalorder %s33, 0
    %p117 = por %p115, %p116
    %p118 = scmp.ne.s32.totalorder %s106, %s107
    %p119 = scmp.eq.s32.totalorder %s34, 1
    %p120 = por %p118, %p119
    %p122 = scmp.ne.s32.totalorder %s107, %s121
    %p123 = scmp.eq.s32.totalorder %s34, 0
    %p124 = por %p122, %p123
    %s126 = sadd.s32 %s125, 1
    %p129 = scmp.eq.s32.totalorder %s28, 1
    %p130 = scmp.ne.s32.totalorder %s125, %s127
    %p131 = scmp.eq.s32.totalorder %s28, 0
    %p132 = por %p130, %p131
    %p133 = scmp.ne.s32.totalorder %s125, %s127
    %p134 = scmp.eq.s32.totalorder %s33, 1
    %p135 = por %p133, %p134
    %p136 = scmp.ne.s32.totalorder %s127, %s128
    %p137 = scmp.eq.s32.totalorder %s33, 0
    %p138 = por %p136, %p137
    %p139 = scmp.ne.s32.totalorder %s127, %s128
    %p140 = scmp.eq.s32.totalorder %s34, 1
    %p141 = por %p139, %p140
    %p143 = scmp.ne.s32.totalorder %s128, %s142
    %p144 = scmp.eq.s32.totalorder %s34, 0
    %p145 = por %p143, %p144
    %s147 = sadd.s32 %s146, 1
    %p150 = scmp.eq.s32.totalorder %s28, 1
    %p151 = scmp.ne.s32.totalorder %s146, %s148
    %p152 = scmp.eq.s32.totalorder %s28, 0
    %p153 = por %p151, %p152
    %p154 = scmp.ne.s32.totalorder %s146, %s148
    %p155 = scmp.eq.s32.totalorder %s33, 1
    %p156 = por %p154, %p155
    %p157 = scmp.ne.s32.totalorder %s148, %s149
    %p158 = scmp.eq.s32.totalorder %s33, 0
    %p159 = por %p157, %p158
    %p160 = scmp.ne.s32.totalorder %s148, %s149
    %p161 = scmp.eq.s32.totalorder %s34, 1
    %p162 = por %p160, %p161
    %p164 = scmp.ne.s32.totalorder %s149, %s163
    %p165 = scmp.eq.s32.totalorder %s34, 0
    %p166 = por %p164, %p165
    %s168 = sadd.s32 %s167, 1
    %p171 = scmp.eq.s32.totalorder %s28, 1
    %p172 = scmp.ne.s32.totalorder %s167, %s169
    %p173 = scmp.eq.s32.totalorder %s28, 0
    %p174 = por %p172, %p173
    %p175 = scmp.ne.s32.totalorder %s167, %s169
    %p176 = scmp.eq.s32.totalorder %s33, 1
    %p177 = por %p175, %p176
    %p178 = scmp.ne.s32.totalorder %s169, %s170
    %p179 = scmp.eq.s32.totalorder %s33, 0
    %p180 = por %p178, %p179
    %p181 = scmp.ne.s32.totalorder %s169, %s170
    %p182 = scmp.eq.s32.totalorder %s34, 1
    %p183 = por %p181, %p182
    %p185 = scmp.ne.s32.totalorder %s170, %s184
    %p186 = scmp.eq.s32.totalorder %s34, 0
    %p187 = por %p185, %p186
    %s189 = sadd.s32 %s188, 1
    %p192 = scmp.eq.s32.totalorder %s28, 1
    %p193 = scmp.ne.s32.totalorder %s188, %s190
    %p194 = scmp.eq.s32.totalorder %s28, 0
    %p195 = por %p193, %p194
    %p196 = scmp.ne.s32.totalorder %s188, %s190
    %p197 = scmp.eq.s32.totalorder %s33, 1
    %p198 = por %p196, %p197
    %p199 = scmp.ne.s32.totalorder %s190, %s191
    %p200 = scmp.eq.s32.totalorder %s33, 0
    %p201 = por %p199, %p200
    %p202 = scmp.ne.s32.totalorder %s190, %s191
    %p203 = scmp.eq.s32.totalorder %s34, 1
    %p204 = por %p202, %p203
    %p206 = scmp.ne.s32.totalorder %s191, %s205
    %p207 = scmp.eq.s32.totalorder %s34, 0
    %p208 = por %p206, %p207
    %s210 = sadd.s32 %s209, 1
    %p213 = scmp.eq.s32.totalorder %s28, 1
    %p214 = scmp.ne.s32.totalorder %s209, %s211
    %p215 = scmp.eq.s32.totalorder %s28, 0
    %p216 = por %p214, %p215
    %p217 = scmp.ne.s32.totalorder %s209, %s211
    %p218 = scmp.eq.s32.totalorder %s33, 1
    %p219 = por %p217, %p218
    %p220 = scmp.ne.s32.totalorder %s211, %s212
    %p221 = scmp.eq.s32.totalorder %s33, 0
    %p222 = por %p220, %p221
    %p223 = scmp.ne.s32.totalorder %s211, %s212
    %p224 = scmp.eq.s32.totalorder %s34, 1
    %p225 = por %p223, %p224
    %p227 = scmp.ne.s32.totalorder %s212, %s226
    %p228 = scmp.eq.s32.totalorder %s34, 0
    %p229 = por %p227, %p228
    %s231 = sadd.s32 %s230, 1
    %p234 = scmp.eq.s32.totalorder %s28, 1
    %p235 = scmp.ne.s32.totalorder %s230, %s232
    %p236 = scmp.eq.s32.totalorder %s28, 0
    %p237 = por %p235, %p236
    %p238 = scmp.ne.s32.totalorder %s230, %s232
    %p239 = scmp.eq.s32.totalorder %s33, 1
    %p240 = por %p238, %p239
    %p241 = scmp.ne.s32.totalorder %s232, %s233
    %p242 = scmp.eq.s32.totalorder %s33, 0
    %p243 = por %p241, %p242
    %p244 = scmp.ne.s32.totalorder %s232, %s233
    %p245 = scmp.eq.s32.totalorder %s34, 1
    %p246 = por %p244, %p245
    %p248 = scmp.ne.s32.totalorder %s233, %s247
    %p249 = scmp.eq.s32.totalorder %s34, 0
    %p250 = por %p248, %p249
    %s252 = sadd.s32 %s251, 1
    %p255 = scmp.eq.s32.totalorder %s28, 1
    %p256 = scmp.ne.s32.totalorder %s251, %s253
    %p257 = scmp.eq.s32.totalorder %s28, 0
    %p258 = por %p256, %p257
    %p259 = scmp.ne.s32.totalorder %s251, %s253
    %p260 = scmp.eq.s32.totalorder %s33, 1
    %p261 = por %p259, %p260
    %p262 = scmp.ne.s32.totalorder %s253, %s254
    %p263 = scmp.eq.s32.totalorder %s33, 0
    %p264 = por %p262, %p263
    %p265 = scmp.ne.s32.totalorder %s253, %s254
    %p266 = scmp.eq.s32.totalorder %s34, 1
    %p267 = por %p265, %p266
    %p269 = scmp.ne.s32.totalorder %s254, %s268
    %p270 = scmp.eq.s32.totalorder %s34, 0
    %p271 = por %p269, %p270
    %s273 = sadd.s32 %s272, 1
    %p276 = scmp.eq.s32.totalorder %s28, 1
    %p277 = scmp.ne.s32.totalorder %s272, %s274
    %p278 = scmp.eq.s32.totalorder %s28, 0
    %p279 = por %p277, %p278
    %p280 = scmp.ne.s32.totalorder %s272, %s274
    %p281 = scmp.eq.s32.totalorder %s33, 1
    %p282 = por %p280, %p281
    %p283 = scmp.ne.s32.totalorder %s274, %s275
    %p284 = scmp.eq.s32.totalorder %s33, 0
    %p285 = por %p283, %p284
    %p286 = scmp.ne.s32.totalorder %s274, %s275
    %p287 = scmp.eq.s32.totalorder %s34, 1
    %p288 = por %p286, %p287
    %p290 = scmp.ne.s32.totalorder %s275, %s289
    %p291 = scmp.eq.s32.totalorder %s34, 0
    %p292 = por %p290, %p291
    %s294 = sadd.s32 %s293, 1
    %p297 = scmp.eq.s32.totalorder %s28, 1
    %p298 = scmp.ne.s32.totalorder %s293, %s295
    %p299 = scmp.eq.s32.totalorder %s28, 0
    %p300 = por %p298, %p299
    %p301 = scmp.ne.s32.totalorder %s293, %s295
    %p302 = scmp.eq.s32.totalorder %s33, 1
    %p303 = por %p301, %p302
    %p304 = scmp.ne.s32.totalorder %s295, %s296
    %p305 = scmp.eq.s32.totalorder %s33, 0
    %p306 = por %p304, %p305
    %p307 = scmp.ne.s32.totalorder %s295, %s296
    %p308 = scmp.eq.s32.totalorder %s34, 1
    %p309 = por %p307, %p308
    %p311 = scmp.ne.s32.totalorder %s296, %s310
    %p312 = scmp.eq.s32.totalorder %s34, 0
    %p313 = por %p311, %p312
    %s315 = sadd.s32 %s314, 1
    %p318 = scmp.eq.s32.totalorder %s28, 1
    %p319 = scmp.ne.s32.totalorder %s314, %s316
    %p320 = scmp.eq.s32.totalorder %s28, 0
    %p321 = por %p319, %p320
    %p322 = scmp.ne.s32.totalorder %s314, %s316
    %p323 = scmp.eq.s32.totalorder %s33, 1
    %p324 = por %p322, %p323
    %p325 = scmp.ne.s32.totalorder %s316, %s317
    %p326 = scmp.eq.s32.totalorder %s33, 0
    %p327 = por %p325, %p326
    %p328 = scmp.ne.s32.totalorder %s316, %s317
    %p329 = scmp.eq.s32.totalorder %s34, 1
    %p330 = por %p328, %p329
    %p332 = scmp.ne.s32.totalorder %s317, %s331
    %p333 = scmp.eq.s32.totalorder %s34, 0
    %p334 = por %p332, %p333
    %s336 = sadd.s32 %s335, 1
    %p339 = scmp.eq.s32.totalorder %s28, 1
    %p340 = scmp.ne.s32.totalorder %s335, %s337
    %p341 = scmp.eq.s32.totalorder %s28, 0
    %p342 = por %p340, %p341
    %p343 = scmp.ne.s32.totalorder %s335, %s337
    %p344 = scmp.eq.s32.totalorder %s33, 1
    %p345 = por %p343, %p344
    %p346 = scmp.ne.s32.totalorder %s337, %s338
    %p347 = scmp.eq.s32.totalorder %s33, 0
    %p348 = por %p346, %p347
    %p349 = scmp.ne.s32.totalorder %s337, %s338
    %p350 = scmp.eq.s32.totalorder %s34, 1
    %p351 = por %p349, %p350
    %p353 = scmp.ne.s32.totalorder %s338, %s352
    %p354 = scmp.eq.s32.totalorder %s34, 0
    %p355 = por %p353, %p354
    %s357 = sadd.s32 %s356, 1
    %p360 = scmp.eq.s32.totalorder %s28, 1
    %p361 = scmp.ne.s32.totalorder %s356, %s358
    %p362 = scmp.eq.s32.totalorder %s28, 0
    %p363 = por %p361, %p362
    %p364 = scmp.ne.s32.totalorder %s356, %s358
    %p365 = scmp.eq.s32.totalorder %s33, 1
    %p366 = por %p364, %p365
    %p367 = scmp.ne.s32.totalorder %s358, %s359
    %p368 = scmp.eq.s32.totalorder %s33, 0
    %p369 = por %p367, %p368
    %p370 = scmp.ne.s32.totalorder %s358, %s359
    %p371 = scmp.eq.s32.totalorder %s34, 1
    %p372 = por %p370, %p371
    %p374 = scmp.ne.s32.totalorder %s359, %s373
    %p375 = scmp.eq.s32.totalorder %s34, 0
    %p376 = por %p374, %p375
    %s378 = sadd.s32 %s377, 1
    %p381 = scmp.eq.s32.totalorder %s28, 1
    %p382 = scmp.ne.s32.totalorder %s377, %s379
    %p383 = scmp.eq.s32.totalorder %s28, 0
    %p384 = por %p382, %p383
    %p385 = scmp.ne.s32.totalorder %s377, %s379
    %p386 = scmp.eq.s32.totalorder %s33, 1
    %p387 = por %p385, %p386
    %p388 = scmp.ne.s32.totalorder %s379, %s380
    %p389 = scmp.eq.s32.totalorder %s33, 0
    %p390 = por %p388, %p389
    %p391 = scmp.ne.s32.totalorder %s379, %s380
    %p392 = scmp.eq.s32.totalorder %s34, 1
    %p393 = por %p391, %p392
    %p395 = scmp.ne.s32.totalorder %s380, %s394
    %p396 = scmp.eq.s32.totalorder %s34, 0
    %p397 = por %p395, %p396
    %s399 = sadd.s32 %s398, 1
    %p402 = scmp.eq.s32.totalorder %s28, 1
    %p403 = scmp.ne.s32.totalorder %s398, %s400
    %p404 = scmp.eq.s32.totalorder %s28, 0
    %p405 = por %p403, %p404
    %p406 = scmp.ne.s32.totalorder %s398, %s400
    %p407 = scmp.eq.s32.totalorder %s33, 1
    %p408 = por %p406, %p407
    %p409 = scmp.ne.s32.totalorder %s400, %s401
    %p410 = scmp.eq.s32.totalorder %s33, 0
    %p411 = por %p409, %p410
    %p412 = scmp.ne.s32.totalorder %s400, %s401
    %p413 = scmp.eq.s32.totalorder %s34, 1
    %p414 = por %p412, %p413
    %p416 = scmp.ne.s32.totalorder %s401, %s415
    %p417 = scmp.eq.s32.totalorder %s34, 0
    %p418 = por %p416, %p417
    %s420 = sadd.s32 %s419, 1
    %p423 = scmp.eq.s32.totalorder %s28, 1
    %p424 = scmp.ne.s32.totalorder %s419, %s421
    %p425 = scmp.eq.s32.totalorder %s28, 0
    %p426 = por %p424, %p425
    %p427 = scmp.ne.s32.totalorder %s419, %s421
    %p428 = scmp.eq.s32.totalorder %s33, 1
    %p429 = por %p427, %p428
    %p430 = scmp.ne.s32.totalorder %s421, %s422
    %p431 = scmp.eq.s32.totalorder %s33, 0
    %p432 = por %p430, %p431
    %p433 = scmp.ne.s32.totalorder %s421, %s422
    %p434 = scmp.eq.s32.totalorder %s34, 1
    %p435 = por %p433, %p434
    %p437 = scmp.ne.s32.totalorder %s422, %s436
    %p438 = scmp.eq.s32.totalorder %s34, 0
    %p439 = por %p437, %p438
    %s441 = sadd.s32 %s440, 1
    %p444 = scmp.eq.s32.totalorder %s28, 1
    %p445 = scmp.ne.s32.totalorder %s440, %s442
    %p446 = scmp.eq.s32.totalorder %s28, 0
    %p447 = por %p445, %p446
    %p448 = scmp.ne.s32.totalorder %s440, %s442
    %p449 = scmp.eq.s32.totalorder %s33, 1
    %p450 = por %p448, %p449
    %p451 = scmp.ne.s32.totalorder %s442, %s443
    %p452 = scmp.eq.s32.totalorder %s33, 0
    %p453 = por %p451, %p452
    %p454 = scmp.ne.s32.totalorder %s442, %s443
    %p455 = scmp.eq.s32.totalorder %s34, 1
    %p456 = por %p454, %p455
    %p458 = scmp.ne.s32.totalorder %s443, %s457
    %p459 = scmp.eq.s32.totalorder %s34, 0
    %p460 = por %p458, %p459
    %s461 = ssub.s32 %s28, %s35
    %p462 = scmp.eq.s32.totalorder %s461, 0
    %s464 = sadd.s32 %s463, 1
    %s465 = scalar_select %p462, %s463, %s464
    %p468 = pneg %p462
    %p469 = scmp.eq.s32.totalorder %s28, 1
    %p470 = por %p468, %p469
    %p471 = scmp.ne.s32.totalorder %s463, %s466
    %p472 = scmp.eq.s32.totalorder %s28, 0
    %p473 = por %p471, %p472
    %p474 = scmp.ne.s32.totalorder %s463, %s466
    %p475 = scmp.eq.s32.totalorder %s33, 1
    %p476 = por %p474, %p475
    %p477 = scmp.ne.s32.totalorder %s466, %s467
    %p478 = scmp.eq.s32.totalorder %s33, 0
    %p479 = por %p477, %p478
    %p480 = scmp.ne.s32.totalorder %s466, %s467
    %p481 = scmp.eq.s32.totalorder %s34, 1
    %p482 = por %p480, %p481
    %p484 = scmp.ne.s32.totalorder %s467, %s483
    %p485 = scmp.eq.s32.totalorder %s34, 0
    %p486 = por %p484, %p485
    %s487 = ssub.s32 %s28, %s35
    %p488 = scmp.eq.s32.totalorder %s487, 0
    %s490 = sadd.s32 %s489, 1
    %s491 = scalar_select %p488, %s489, %s490
    %p494 = pneg %p488
    %p495 = scmp.eq.s32.totalorder %s28, 1
    %p496 = por %p494, %p495
    %p497 = scmp.ne.s32.totalorder %s489, %s492
    %p498 = scmp.eq.s32.totalorder %s28, 0
    %p499 = por %p497, %p498
    %p500 = scmp.ne.s32.totalorder %s489, %s492
    %p501 = scmp.eq.s32.totalorder %s33, 1
    %p502 = por %p500, %p501
    %p503 = scmp.ne.s32.totalorder %s492, %s493
    %p504 = scmp.eq.s32.totalorder %s33, 0
    %p505 = por %p503, %p504
    %p506 = scmp.ne.s32.totalorder %s492, %s493
    %p507 = scmp.eq.s32.totalorder %s34, 1
    %p508 = por %p506, %p507
    %p510 = scmp.ne.s32.totalorder %s493, %s509
    %p511 = scmp.eq.s32.totalorder %s34, 0
    %p512 = por %p510, %p511
    %p513 = scmp.le.s32.totalorder 1, %s28
    %p514 = scmp.lt.s32.totalorder %s28, 3
    %p515 = pnand %p513, %p514
    %p516 = pneg %p515
    // Predicated region
    $region9: #{conv_lstm_attention.1} parent=5 // pred_check
      _
    $region10: #{conv_lstm_attention.1} parent=5 // pred_check_branch
      %518 = sbr.rel (%p515) target = $region12
    $region11: #{conv_lstm_attention.1} parent=5 // pred_region
      %s519 = ssub.s32 %s28, 1
      // Predicated region
      $region13: #{conv_lstm_attention.1} parent=11 // pred_check
        %p520 = pneg %p75
      $region14: #{conv_lstm_attention.1} parent=11 // pred_check_branch
        %522 = sbr.rel (%p520) target = $region16
      $region15: #{conv_lstm_attention.1} parent=11 // pred_region
        _
      $region16: #{conv_lstm_attention.1} parent=11 // pred_fallthru
        _
      // Predicated region
      $region17: #{conv_lstm_attention.1} parent=11 // pred_check
        %p523 = pneg %p96
      $region18: #{conv_lstm_attention.1} parent=11 // pred_check_branch
        %525 = sbr.rel (%p523) target = $region20
      $region19: #{conv_lstm_attention.1} parent=11 // pred_region
        _
      $region20: #{conv_lstm_attention.1} parent=11 // pred_fallthru
        _
      // Predicated region
      $region21: #{conv_lstm_attention.1} parent=11 // pred_check
        %p526 = pneg %p117
      $region22: #{conv_lstm_attention.1} parent=11 // pred_check_branch
        %528 = sbr.rel (%p526) target = $region24
      $region23: #{conv_lstm_attention.1} parent=11 // pred_region
        _
      $region24: #{conv_lstm_attention.1} parent=11 // pred_fallthru
        _
      // Predicated region
      $region25: #{conv_lstm_attention.1} parent=11 // pred_check
        %p529 = pneg %p138
      $region26: #{conv_lstm_attention.1} parent=11 // pred_check_branch
        %531 = sbr.rel (%p529) target = $region28
      $region27: #{conv_lstm_attention.1} parent=11 // pred_region
        _
      $region28: #{conv_lstm_attention.1} parent=11 // pred_fallthru
        _
      // Predicated region
      $region29: #{conv_lstm_attention.1} parent=11 // pred_check
        %p532 = pneg %p159
      $region30: #{conv_lstm_attention.1} parent=11 // pred_check_branch
        %534 = sbr.rel (%p532) target = $region32
      $region31: #{conv_lstm_attention.1} parent=11 // pred_region
        _
      $region32: #{conv_lstm_attention.1} parent=11 // pred_fallthru
        _
      // Predicated region
      $region33: #{conv_lstm_attention.1} parent=11 // pred_check
        %p535 = pneg %p180
      $region34: #{conv_lstm_attention.1} parent=11 // pred_check_branch
        %537 = sbr.rel (%p535) target = $region36
      $region35: #{conv_lstm_attention.1} parent=11 // pred_region
        _
      $region36: #{conv_lstm_attention.1} parent=11 // pred_fallthru
        _
      // Predicated region
      $region37: #{conv_lstm_attention.1} parent=11 // pred_check
        %p538 = pneg %p201
      $region38: #{conv_lstm_attention.1} parent=11 // pred_check_branch
        %540 = sbr.rel (%p538) target = $region40
      $region39: #{conv_lstm_attention.1} parent=11 // pred_region
        _
      $region40: #{conv_lstm_attention.1} parent=11 // pred_fallthru
        _
      // Predicated region
      $region41: #{conv_lstm_attention.1} parent=11 // pred_check
        %p541 = pneg %p222
      $region42: #{conv_lstm_attention.1} parent=11 // pred_check_branch
        %543 = sbr.rel (%p541) target = $region44
      $region43: #{conv_lstm_attention.1} parent=11 // pred_region
        _
      $region44: #{conv_lstm_attention.1} parent=11 // pred_fallthru
        _
      // Predicated region
      $region45: #{conv_lstm_attention.1} parent=11 // pred_check
        %p544 = pneg %p243
      $region46: #{conv_lstm_attention.1} parent=11 // pred_check_branch
        %546 = sbr.rel (%p544) target = $region48
      $region47: #{conv_lstm_attention.1} parent=11 // pred_region
        _
      $region48: #{conv_lstm_attention.1} parent=11 // pred_fallthru
        _
      // Predicated region
      $region49: #{conv_lstm_attention.1} parent=11 // pred_check
        %p547 = pneg %p264
      $region50: #{conv_lstm_attention.1} parent=11 // pred_check_branch
        %549 = sbr.rel (%p547) target = $region52
      $region51: #{conv_lstm_attention.1} parent=11 // pred_region
        _
      $region52: #{conv_lstm_attention.1} parent=11 // pred_fallthru
        _
      // Predicated region
      $region53: #{conv_lstm_attention.1} parent=11 // pred_check
        %p550 = pneg %p285
      $region54: #{conv_lstm_attention.1} parent=11 // pred_check_branch
        %552 = sbr.rel (%p550) target = $region56
      $region55: #{conv_lstm_attention.1} parent=11 // pred_region
        _
      $region56: #{conv_lstm_attention.1} parent=11 // pred_fallthru
        _
      // Predicated region
      $region57: #{conv_lstm_attention.1} parent=11 // pred_check
        %p553 = pneg %p306
      $region58: #{conv_lstm_attention.1} parent=11 // pred_check_branch
        %555 = sbr.rel (%p553) target = $region60
      $region59: #{conv_lstm_attention.1} parent=11 // pred_region
        _
      $region60: #{conv_lstm_attention.1} parent=11 // pred_fallthru
        _
      // Predicated region
      $region61: #{conv_lstm_attention.1} parent=11 // pred_check
        %p556 = pneg %p327
      $region62: #{conv_lstm_attention.1} parent=11 // pred_check_branch
        %558 = sbr.rel (%p556) target = $region64
      $region63: #{conv_lstm_attention.1} parent=11 // pred_region
        _
      $region64: #{conv_lstm_attention.1} parent=11 // pred_fallthru
        _
      // Predicated region
      $region65: #{conv_lstm_attention.1} parent=11 // pred_check
        %p559 = pneg %p348
      $region66: #{conv_lstm_attention.1} parent=11 // pred_check_branch
        %561 = sbr.rel (%p559) target = $region68
      $region67: #{conv_lstm_attention.1} parent=11 // pred_region
        _
      $region68: #{conv_lstm_attention.1} parent=11 // pred_fallthru
        _
      // Predicated region
      $region69: #{conv_lstm_attention.1} parent=11 // pred_check
        %p562 = pneg %p369
      $region70: #{conv_lstm_attention.1} parent=11 // pred_check_branch
        %564 = sbr.rel (%p562) target = $region72
      $region71: #{conv_lstm_attention.1} parent=11 // pred_region
        _
      $region72: #{conv_lstm_attention.1} parent=11 // pred_fallthru
        _
      // Predicated region
      $region73: #{conv_lstm_attention.1} parent=11 // pred_check
        %p565 = pneg %p390
      $region74: #{conv_lstm_attention.1} parent=11 // pred_check_branch
        %567 = sbr.rel (%p565) target = $region76
      $region75: #{conv_lstm_attention.1} parent=11 // pred_region
        _
      $region76: #{conv_lstm_attention.1} parent=11 // pred_fallthru
        _
      // Predicated region
      $region77: #{conv_lstm_attention.1} parent=11 // pred_check
        %p568 = pneg %p411
      $region78: #{conv_lstm_attention.1} parent=11 // pred_check_branch
        %570 = sbr.rel (%p568) target = $region80
      $region79: #{conv_lstm_attention.1} parent=11 // pred_region
        _
      $region80: #{conv_lstm_attention.1} parent=11 // pred_fallthru
        _
      // Predicated region
      $region81: #{conv_lstm_attention.1} parent=11 // pred_check
        %p571 = pneg %p432
      $region82: #{conv_lstm_attention.1} parent=11 // pred_check_branch
        %573 = sbr.rel (%p571) target = $region84
      $region83: #{conv_lstm_attention.1} parent=11 // pred_region
        _
      $region84: #{conv_lstm_attention.1} parent=11 // pred_fallthru
        _
      // Predicated region
      $region85: #{conv_lstm_attention.1} parent=11 // pred_check
        %p574 = pneg %p453
      $region86: #{conv_lstm_attention.1} parent=11 // pred_check_branch
        %576 = sbr.rel (%p574) target = $region88
      $region87: #{conv_lstm_attention.1} parent=11 // pred_region
        _
      $region88: #{conv_lstm_attention.1} parent=11 // pred_fallthru
        _
    $region12: #{conv_lstm_attention.1} parent=5 // pred_fallthru
      _
    %p577 = scmp.lt.s32.totalorder %s28, 2
    // Predicated region
    $region89: #{conv_lstm_attention.1} parent=5 // pred_check
      %p578 = pneg %p577
    $region90: #{conv_lstm_attention.1} parent=5 // pred_check_branch
      %580 = sbr.rel (%p578) target = $region92
    $region91: #{conv_lstm_attention.1} parent=5 // pred_region
      // Predicated region
      $region93: #{conv_lstm_attention.1} parent=91 // pred_check
        %p581 = pneg %p48
      $region94: #{conv_lstm_attention.1} parent=91 // pred_check_branch
        %583 = sbr.rel (%p581) target = $region96
      $region95: #{conv_lstm_attention.1} parent=91 // pred_region
        %s584 = smul.u32 16, %s28
        %p585 = scmp.lt.s32.totalorder %s584, 31
        %s586 = scalar_select %p585, %s584, 31
        %s587 = smul.addr %s586, 8
        %s588 = scalar_lea.vmem %s0, %s587
        %s589 = smul.u32 16, %s28
      $region96: #{conv_lstm_attention.1} parent=91 // pred_fallthru
        _
    $region92: #{conv_lstm_attention.1} parent=5 // pred_fallthru
      _
    %p590 = scmp.le.s32.totalorder 1, %s28
    %p591 = scmp.lt.s32.totalorder %s28, 3
    %p592 = pnand %p590, %p591
    %p593 = pneg %p592
    // Predicated region
    $region97: #{conv_lstm_attention.1} parent=5 // pred_check
      _
    $region98: #{conv_lstm_attention.1} parent=5 // pred_check_branch
      %595 = sbr.rel (%p592) target = $region100
    $region99: #{conv_lstm_attention.1} parent=5 // pred_region
      %s596 = ssub.s32 %s28, 1
      %s597 = smul.u32 16, %s33
      %p598 = scmp.lt.s32.totalorder %s597, 31
      %s599 = scalar_select %p598, %s597, 31
      %s600 = smul.addr %s599, 8
      %s601 = scalar_lea.vmem %s0, %s600
      %p602 = pneg %p54
      %p603 = pneg %p51
      %p604 = pneg %p75
      %p605 = pneg %p72
      %p606 = pneg %p96
      %p607 = pneg %p93
      %p608 = pneg %p117
      %p609 = pneg %p114
      %p610 = pneg %p138
      %p611 = pneg %p135
      %p612 = pneg %p159
      %p613 = pneg %p156
      %p614 = pneg %p180
      %p615 = pneg %p177
      %p616 = pneg %p201
      %p617 = pneg %p198
      %p618 = pneg %p222
      %p619 = pneg %p219
      %p620 = pneg %p243
      %p621 = pneg %p240
      %p622 = pneg %p264
      %p623 = pneg %p261
      %p624 = pneg %p285
      %p625 = pneg %p282
      %p626 = pneg %p306
      %p627 = pneg %p303
      %p628 = pneg %p327
      %p629 = pneg %p324
      %p630 = pneg %p348
      %p631 = pneg %p345
      %p632 = pneg %p369
      %p633 = pneg %p366
      %p634 = pneg %p390
      %p635 = pneg %p387
      %p636 = pneg %p411
      %p637 = pneg %p408
      %p638 = pneg %p432
      %p639 = pneg %p429
      %p640 = pneg %p453
      %p641 = pneg %p450
      %p642 = pneg %p479
      %p643 = pneg %p476
      %p644 = scmp.lt.s32.totalorder %s33, 1
      %s645 = scalar_select %p644, %s33, 1
      %s646 = smul.addr %s645, 8
      %s647 = scalar_lea.vmem %s20, %s646
      %p648 = pneg %p505
      %p649 = pneg %p502
      %p650 = scmp.lt.s32.totalorder %s33, 1
      %s651 = scalar_select %p650, %s33, 1
      %s652 = smul.addr %s651, 8
      %s653 = scalar_lea.vmem %s21, %s652
      %s654 = smul.u32 16, %s33
      %p655 = scmp.lt.s32.totalorder %s654, 31
      %s656 = scalar_select %p655, %s654, 31
      %s657 = smul.addr %s656, 8
      %s658 = scalar_lea.vmem %s0, %s657
      %s659 = smul.u32 16, %s33
      %p660 = scmp.lt.s32.totalorder %s33, 1
      %s661 = scalar_select %p660, %s33, 1
      %s662 = smul.addr %s661, 8
      %s663 = scalar_lea.vmem %s20, %s662
      %p664 = scmp.lt.s32.totalorder %s33, 1
      %s665 = scalar_select %p664, %s33, 1
      %s666 = smul.addr %s665, 8
      %s667 = scalar_lea.vmem %s21, %s666
      %v668 = vld [vmem:[%s658] sm:$0xff]
      %v669 = vld [vmem:[%s658 + $0x8] sm:$0xff]
      %v670 = vld [vmem:[%s658 + $0x10] sm:$0xff]
      %v671 = vld [vmem:[%s658 + $0x18] sm:$0xff]
      %v672 = vld [vmem:[%s658 + $0x20] sm:$0xff]
      %v673 = vld [vmem:[%s658 + $0x28] sm:$0xff]
      %v674 = vld [vmem:[%s658 + $0x30] sm:$0xff]
      %v675 = vld [vmem:[%s658 + $0x38] sm:$0xff]
      %v676 = vld [vmem:[%s658 + $0x40] sm:$0xff]
      %v677 = vld [vmem:[%s658 + $0x48] sm:$0xff]
      %v678 = vld [vmem:[%s658 + $0x50] sm:$0xff]
      %v679 = vld [vmem:[%s658 + $0x58] sm:$0xff]
      %v680 = vld [vmem:[%s658 + $0x60] sm:$0xff]
      %v681 = vld [vmem:[%s658 + $0x68] sm:$0xff]
      %v682 = vld [vmem:[%s658 + $0x70] sm:$0xff]
      %v683 = vld [vmem:[%s658 + $0x78] sm:$0xff]
      %v684 = vld [vmem:[%s1] sm:$0xff]
      %v685 = vld [vmem:[%s1 + $0x8] sm:$0xf]
      %v686 = vld [vmem:[%s2] sm:$0x1]
      %v688 = vperm.slane %v686, 0
      %vm690 = vcmask 97280
      %v692 = vsel %vm690, %v668, 0
      %v695 = vsel %vm690, %v669, 0
      %v698 = vsel %vm690, %v670, 0
      %v701 = vsel %vm690, %v671, 0
      %v704 = vsel %vm690, %v672, 0
      %v707 = vsel %vm690, %v673, 0
      %v710 = vsel %vm690, %v674, 0
      %v713 = vsel %vm690, %v675, 0
      %v716 = vsel %vm690, %v676, 0
      %v719 = vsel %vm690, %v677, 0
      %v722 = vsel %vm690, %v678, 0
      %v725 = vsel %vm690, %v679, 0
      %v728 = vsel %vm690, %v680, 0
      %v731 = vsel %vm690, %v681, 0
      %v734 = vsel %vm690, %v682, 0
      %v737 = vsel %vm690, %v683, 0
      %vm739 = vcmask 1043456
      %v741 = vsel %vm739, %v685, 0
      %743 = vmatpush.msra.mxu0 0.0
      %744 = vmatpush.msra.mxu0 0.0
      %745 = vmatpush.msra.mxu0 0.0
      %746 = vmatpush.msra.mxu0 0.0
      %747 = vmatpush.msra.mxu0 0.0
      %748 = vmatpush.msra.mxu0 0.0
      %749 = vmatpush.msra.mxu0 0.0
      %750 = vmatpush.msra.mxu0 0.0
      %751 = vmatpush.msra.mxu0 0.0
      %752 = vmatpush.msra.mxu0 0.0
      %753 = vmatpush.msra.mxu0 0.0
      %754 = vmatpush.msra.mxu0 0.0
      %755 = vmatpush.msra.mxu0 0.0
      %756 = vmatpush.msra.mxu0 0.0
      %757 = vmatpush.msra.mxu0 %v741
      %758 = vmatpush.msra.mxu0 %v684
      %759 = vmatmul.f32.gmra.mxu0 %v692
      %v760 = vpop.f32.mrf.mxu0
      %v761 = vadd.f32 %v688, %v760
      %762 = vmatmul.f32.gmra.mxu0 %v695
      %v763 = vpop.f32.mrf.mxu0
      %v764 = vadd.f32 %v688, %v763
      %765 = vmatmul.f32.gmra.mxu0 %v698
      %v766 = vpop.f32.mrf.mxu0
      %v767 = vadd.f32 %v688, %v766
      %768 = vmatmul.f32.gmra.mxu0 %v701
      %v769 = vpop.f32.mrf.mxu0
      %v770 = vadd.f32 %v688, %v769
      %771 = vmatmul.f32.gmra.mxu0 %v704
      %v772 = vpop.f32.mrf.mxu0
      %v773 = vadd.f32 %v688, %v772
      %774 = vmatmul.f32.gmra.mxu0 %v707
      %v775 = vpop.f32.mrf.mxu0
      %v776 = vadd.f32 %v688, %v775
      %777 = vmatmul.f32.gmra.mxu0 %v710
      %v778 = vpop.f32.mrf.mxu0
      %v779 = vadd.f32 %v688, %v778
      %780 = vmatmul.f32.gmra.mxu0 %v713
      %v781 = vpop.f32.mrf.mxu0
      %v782 = vadd.f32 %v688, %v781
      %783 = vmatmul.f32.gmra.mxu0 %v716
      %v784 = vpop.f32.mrf.mxu0
      %v785 = vadd.f32 %v688, %v784
      %786 = vmatmul.f32.gmra.mxu0 %v719
      %v787 = vpop.f32.mrf.mxu0
      %v788 = vadd.f32 %v688, %v787
      %789 = vmatmul.f32.gmra.mxu0 %v722
      %v790 = vpop.f32.mrf.mxu0
      %v791 = vadd.f32 %v688, %v790
      %792 = vmatmul.f32.gmra.mxu0 %v725
      %v793 = vpop.f32.mrf.mxu0
      %v794 = vadd.f32 %v688, %v793
      %795 = vmatmul.f32.gmra.mxu0 %v728
      %v796 = vpop.f32.mrf.mxu0
      %v797 = vadd.f32 %v688, %v796
      %798 = vmatmul.f32.gmra.mxu0 %v731
      %v799 = vpop.f32.mrf.mxu0
      %v800 = vadd.f32 %v688, %v799
      %801 = vmatmul.f32.gmra.mxu0 %v734
      %v802 = vpop.f32.mrf.mxu0
      %v803 = vadd.f32 %v688, %v802
      %804 = vmatmul.f32.gmra.mxu0 %v737
      %v805 = vpop.f32.mrf.mxu0
      %v806 = vadd.f32 %v688, %v805
      %807 = vdwg.mxu0
      %v808 = vmax.f32 %v761, 0.0
      %v809 = vmax.f32 %v764, 0.0
      %v810 = vmax.f32 %v767, 0.0
      %v811 = vmax.f32 %v770, 0.0
      %v812 = vmax.f32 %v773, 0.0
      %v813 = vmax.f32 %v776, 0.0
      %v814 = vmax.f32 %v779, 0.0
      %v815 = vmax.f32 %v782, 0.0
      %v816 = vmax.f32 %v785, 0.0
      %v817 = vmax.f32 %v788, 0.0
      %v818 = vmax.f32 %v791, 0.0
      %v819 = vmax.f32 %v794, 0.0
      %v820 = vmax.f32 %v797, 0.0
      %v821 = vmax.f32 %v800, 0.0
      %v822 = vmax.f32 %v803, 0.0
      %v823 = vmax.f32 %v806, 0.0
      %v824 = vld [vmem:[%s3] sm:$0xff]
      %v825 = vld [vmem:[%s3 + $0x8] sm:$0xff]
      %v826 = vld [vmem:[%s3 + $0x10] sm:$0xff]
      %v827 = vld [vmem:[%s3 + $0x18] sm:$0xff]
      %v828 = vld [vmem:[%s3 + $0x20] sm:$0xff]
      %v829 = vld [vmem:[%s3 + $0x28] sm:$0xff]
      %v830 = vld [vmem:[%s3 + $0x30] sm:$0xff]
      %v831 = vld [vmem:[%s3 + $0x38] sm:$0xff]
      %832 = vmatpush.msra.mxu0 %v823
      %833 = vmatpush.msra.mxu0 %v822
      %834 = vmatpush.msra.mxu0 %v821
      %835 = vmatpush.msra.mxu0 %v820
      %836 = vmatpush.msra.mxu0 %v819
      %837 = vmatpush.msra.mxu0 %v818
      %838 = vmatpush.msra.mxu0 %v817
      %839 = vmatpush.msra.mxu0 %v816
      %840 = vmatpush.msra.mxu0 %v815
      %841 = vmatpush.msra.mxu0 %v814
      %842 = vmatpush.msra.mxu0 %v813
      %843 = vmatpush.msra.mxu0 %v812
      %844 = vmatpush.msra.mxu0 %v811
      %845 = vmatpush.msra.mxu0 %v810
      %846 = vmatpush.msra.mxu0 %v809
      %847 = vmatpush.msra.mxu0 %v808
      %848 = vmatmul.f32.gmra.mxu0 %v824
      %v849 = vpop.f32.mrf.mxu0
      %v850 = vadd.f32 0.0, %v849
      %851 = vmatmul.f32.gmra.mxu0 %v825
      %v852 = vpop.f32.mrf.mxu0
      %v853 = vadd.f32 0.0, %v852
      %854 = vmatmul.f32.gmra.mxu0 %v826
      %v855 = vpop.f32.mrf.mxu0
      %v856 = vadd.f32 0.0, %v855
      %857 = vmatmul.f32.gmra.mxu0 %v827
      %v858 = vpop.f32.mrf.mxu0
      %v859 = vadd.f32 0.0, %v858
      %860 = vmatmul.f32.gmra.mxu0 %v828
      %v861 = vpop.f32.mrf.mxu0
      %v862 = vadd.f32 0.0, %v861
      %863 = vmatmul.f32.gmra.mxu0 %v829
      %v864 = vpop.f32.mrf.mxu0
      %v865 = vadd.f32 0.0, %v864
      %866 = vmatmul.f32.gmra.mxu0 %v830
      %v867 = vpop.f32.mrf.mxu0
      %v868 = vadd.f32 0.0, %v867
      %869 = vmatmul.f32.gmra.mxu0 %v831
      %v870 = vpop.f32.mrf.mxu0
      %v871 = vadd.f32 0.0, %v870
      %872 = vdwg.mxu0
      %v873 = vld [vmem:[%s4] sm:$0xff]
      %v874 = vld [vmem:[%s4 + $0x8] sm:$0xff]
      %v875 = vld [vmem:[%s4 + $0x10] sm:$0xff]
      %v876 = vld [vmem:[%s4 + $0x18] sm:$0xff]
      %v877 = vld [vmem:[%s4 + $0x20] sm:$0xff]
      %v878 = vld [vmem:[%s4 + $0x28] sm:$0xff]
      %v879 = vld [vmem:[%s4 + $0x30] sm:$0xff]
      %v880 = vld [vmem:[%s4 + $0x38] sm:$0xff]
      %881 = vmatpush.msra.mxu0 %v823
      %882 = vmatpush.msra.mxu0 %v822
      %883 = vmatpush.msra.mxu0 %v821
      %884 = vmatpush.msra.mxu0 %v820
      %885 = vmatpush.msra.mxu0 %v819
      %886 = vmatpush.msra.mxu0 %v818
      %887 = vmatpush.msra.mxu0 %v817
      %888 = vmatpush.msra.mxu0 %v816
      %889 = vmatpush.msra.mxu0 %v815
      %890 = vmatpush.msra.mxu0 %v814
      %891 = vmatpush.msra.mxu0 %v813
      %892 = vmatpush.msra.mxu0 %v812
      %893 = vmatpush.msra.mxu0 %v811
      %894 = vmatpush.msra.mxu0 %v810
      %895 = vmatpush.msra.mxu0 %v809
      %896 = vmatpush.msra.mxu0 %v808
      %897 = vmatmul.f32.gmra.mxu0 %v873
      %v898 = vpop.f32.mrf.mxu0
      %v899 = vadd.f32 0.0, %v898
      %900 = vmatmul.f32.gmra.mxu0 %v874
      %v901 = vpop.f32.mrf.mxu0
      %v902 = vadd.f32 0.0, %v901
      %903 = vmatmul.f32.gmra.mxu0 %v875
      %v904 = vpop.f32.mrf.mxu0
      %v905 = vadd.f32 0.0, %v904
      %906 = vmatmul.f32.gmra.mxu0 %v876
      %v907 = vpop.f32.mrf.mxu0
      %v908 = vadd.f32 0.0, %v907
      %909 = vmatmul.f32.gmra.mxu0 %v877
      %v910 = vpop.f32.mrf.mxu0
      %v911 = vadd.f32 0.0, %v910
      %912 = vmatmul.f32.gmra.mxu0 %v878
      %v913 = vpop.f32.mrf.mxu0
      %v914 = vadd.f32 0.0, %v913
      %915 = vmatmul.f32.gmra.mxu0 %v879
      %v916 = vpop.f32.mrf.mxu0
      %v917 = vadd.f32 0.0, %v916
      %918 = vmatmul.f32.gmra.mxu0 %v880
      %v919 = vpop.f32.mrf.mxu0
      %v920 = vadd.f32 0.0, %v919
      %921 = vdwg.mxu0
      %v922 = vmax.f32 %v850, %v899
      %v923 = vmax.f32 %v853, %v902
      %v924 = vmax.f32 %v856, %v905
      %v925 = vmax.f32 %v859, %v908
      %v926 = vmax.f32 %v862, %v911
      %v927 = vmax.f32 %v865, %v914
      %v928 = vmax.f32 %v868, %v917
      %v929 = vmax.f32 %v871, %v920
      %938 = vrot.lane.b32.xlu0 %v922, 64
      %v939 = vpop.permute.xlu0 %938
      %940 = vrot.lane.b32.xlu0 %v923, 64
      %v941 = vpop.permute.xlu0 %940
      %942 = vrot.lane.b32.xlu0 %v924, 64
      %v943 = vpop.permute.xlu0 %942
      %944 = vrot.lane.b32.xlu0 %v925, 64
      %v945 = vpop.permute.xlu0 %944
      %946 = vrot.lane.b32.xlu0 %v926, 64
      %v947 = vpop.permute.xlu0 %946
      %948 = vrot.lane.b32.xlu0 %v927, 64
      %v949 = vpop.permute.xlu0 %948
      %950 = vrot.lane.b32.xlu0 %v928, 64
      %v951 = vpop.permute.xlu0 %950
      %952 = vrot.lane.b32.xlu0 %v929, 64
      %v953 = vpop.permute.xlu0 %952
      %vm962 = vcmask 1048064
      %963 = vst.msk [vmem:[#allocation2] sm:$0xff] %vm962, %v939
      %964 = vst.msk [vmem:[#allocation2 + $0x10] sm:$0xff] %vm962, %v941
      %965 = vst.msk [vmem:[#allocation2 + $0x20] sm:$0xff] %vm962, %v943
      %966 = vst.msk [vmem:[#allocation2 + $0x30] sm:$0xff] %vm962, %v945
      %967 = vst.msk [vmem:[#allocation2 + $0x40] sm:$0xff] %vm962, %v947
      %968 = vst.msk [vmem:[#allocation2 + $0x50] sm:$0xff] %vm962, %v949
      %969 = vst.msk [vmem:[#allocation2 + $0x60] sm:$0xff] %vm962, %v951
      %970 = vst.msk [vmem:[#allocation2 + $0x70] sm:$0xff] %vm962, %v953
      %v971 = vld [vmem:[%s5] sm:$0xff]
      %v972 = vld [vmem:[%s5 + $0x8] sm:$0xff]
      %v973 = vld [vmem:[%s5 + $0x10] sm:$0xff]
      %v974 = vld [vmem:[%s5 + $0x18] sm:$0xff]
      %v975 = vld [vmem:[%s5 + $0x20] sm:$0xff]
      %v976 = vld [vmem:[%s5 + $0x28] sm:$0xff]
      %v977 = vld [vmem:[%s5 + $0x30] sm:$0xff]
      %v978 = vld [vmem:[%s5 + $0x38] sm:$0xff]
      %vm979 = vcmask 523264
      %v981 = vsel %vm979, %v971, 0
      %v984 = vsel %vm979, %v972, 0
      %v987 = vsel %vm979, %v973, 0
      %v990 = vsel %vm979, %v974, 0
      %v993 = vsel %vm979, %v975, 0
      %v996 = vsel %vm979, %v976, 0
      %v999 = vsel %vm979, %v977, 0
      %v1002 = vsel %vm979, %v978, 0
      %1004 = vmatpush.msra.mxu0 0.0
      %1005 = vmatpush.msra.mxu0 0.0
      %1006 = vmatpush.msra.mxu0 0.0
      %1007 = vmatpush.msra.mxu0 0.0
      %1008 = vmatpush.msra.mxu0 0.0
      %1009 = vmatpush.msra.mxu0 0.0
      %1010 = vmatpush.msra.mxu0 0.0
      %1011 = vmatpush.msra.mxu0 0.0
      %1012 = vmatpush.msra.mxu0 %v929
      %1013 = vmatpush.msra.mxu0 %v928
      %1014 = vmatpush.msra.mxu0 %v927
      %1015 = vmatpush.msra.mxu0 %v926
      %1016 = vmatpush.msra.mxu0 %v925
      %1017 = vmatpush.msra.mxu0 %v924
      %1018 = vmatpush.msra.mxu0 %v923
      %1019 = vmatpush.msra.mxu0 %v922
      %1020 = vmatmul.f32.gmra.mxu0 %v981
      %v1021 = vpop.f32.mrf.mxu0
      %v1022 = vadd.f32 0.0, %v1021
      %1023 = vmatmul.f32.gmra.mxu0 %v984
      %v1024 = vpop.f32.mrf.mxu0
      %v1025 = vadd.f32 0.0, %v1024
      %1026 = vmatmul.f32.gmra.mxu0 %v987
      %v1027 = vpop.f32.mrf.mxu0
      %v1028 = vadd.f32 0.0, %v1027
      %1029 = vmatmul.f32.gmra.mxu0 %v990
      %v1030 = vpop.f32.mrf.mxu0
      %v1031 = vadd.f32 0.0, %v1030
      %1032 = vmatmul.f32.gmra.mxu0 %v993
      %v1033 = vpop.f32.mrf.mxu0
      %v1034 = vadd.f32 0.0, %v1033
      %1035 = vmatmul.f32.gmra.mxu0 %v996
      %v1036 = vpop.f32.mrf.mxu0
      %v1037 = vadd.f32 0.0, %v1036
      %1038 = vmatmul.f32.gmra.mxu0 %v999
      %v1039 = vpop.f32.mrf.mxu0
      %v1040 = vadd.f32 0.0, %v1039
      %1041 = vmatmul.f32.gmra.mxu0 %v1002
      %v1042 = vpop.f32.mrf.mxu0
      %v1043 = vadd.f32 0.0, %v1042
      %1044 = vdwg.mxu0
      %1045 = vst.msk [vmem:[#allocation2] sm:$0xff] %vm979, %v1022
      %1046 = vst.msk [vmem:[#allocation2 + $0x10] sm:$0xff] %vm979, %v1025
      %1047 = vst.msk [vmem:[#allocation2 + $0x20] sm:$0xff] %vm979, %v1028
      %1048 = vst.msk [vmem:[#allocation2 + $0x30] sm:$0xff] %vm979, %v1031
      %1049 = vst.msk [vmem:[#allocation2 + $0x40] sm:$0xff] %vm979, %v1034
      %1050 = vst.msk [vmem:[#allocation2 + $0x50] sm:$0xff] %vm979, %v1037
      %1051 = vst.msk [vmem:[#allocation2 + $0x60] sm:$0xff] %vm979, %v1040
      %1052 = vst.msk [vmem:[#allocation2 + $0x70] sm:$0xff] %vm979, %v1043
      %v1053 = vld [vmem:[%s6] sm:$0xff]
      %v1054 = vld [vmem:[%s6 + $0x8] sm:$0xff]
      %v1055 = vld [vmem:[%s6 + $0x10] sm:$0xff]
      %v1056 = vld [vmem:[%s6 + $0x18] sm:$0xff]
      %v1057 = vld [vmem:[%s6 + $0x20] sm:$0xff]
      %v1058 = vld [vmem:[%s6 + $0x28] sm:$0xff]
      %v1059 = vld [vmem:[%s6 + $0x30] sm:$0xff]
      %v1060 = vld [vmem:[%s6 + $0x38] sm:$0xff]
      %v1062 = vsel %vm979, %v1053, 0
      %v1065 = vsel %vm979, %v1054, 0
      %v1068 = vsel %vm979, %v1055, 0
      %v1071 = vsel %vm979, %v1056, 0
      %v1074 = vsel %vm979, %v1057, 0
      %v1077 = vsel %vm979, %v1058, 0
      %v1080 = vsel %vm979, %v1059, 0
      %v1083 = vsel %vm979, %v1060, 0
      %1085 = vmatpush.msra.mxu0 0.0
      %1086 = vmatpush.msra.mxu0 0.0
      %1087 = vmatpush.msra.mxu0 0.0
      %1088 = vmatpush.msra.mxu0 0.0
      %1089 = vmatpush.msra.mxu0 0.0
      %1090 = vmatpush.msra.mxu0 0.0
      %1091 = vmatpush.msra.mxu0 0.0
      %1092 = vmatpush.msra.mxu0 0.0
      %1093 = vmatpush.msra.mxu0 %v929
      %1094 = vmatpush.msra.mxu0 %v928
      %1095 = vmatpush.msra.mxu0 %v927
      %1096 = vmatpush.msra.mxu0 %v926
      %1097 = vmatpush.msra.mxu0 %v925
      %1098 = vmatpush.msra.mxu0 %v924
      %1099 = vmatpush.msra.mxu0 %v923
      %1100 = vmatpush.msra.mxu0 %v922
      %1101 = vmatmul.f32.gmra.mxu0 %v1062
      %v1102 = vpop.f32.mrf.mxu0
      %v1103 = vadd.f32 0.0, %v1102
      %1104 = vmatmul.f32.gmra.mxu0 %v1065
      %v1105 = vpop.f32.mrf.mxu0
      %v1106 = vadd.f32 0.0, %v1105
      %1107 = vmatmul.f32.gmra.mxu0 %v1068
      %v1108 = vpop.f32.mrf.mxu0
      %v1109 = vadd.f32 0.0, %v1108
      %1110 = vmatmul.f32.gmra.mxu0 %v1071
      %v1111 = vpop.f32.mrf.mxu0
      %v1112 = vadd.f32 0.0, %v1111
      %1113 = vmatmul.f32.gmra.mxu0 %v1074
      %v1114 = vpop.f32.mrf.mxu0
      %v1115 = vadd.f32 0.0, %v1114
      %1116 = vmatmul.f32.gmra.mxu0 %v1077
      %v1117 = vpop.f32.mrf.mxu0
      %v1118 = vadd.f32 0.0, %v1117
      %1119 = vmatmul.f32.gmra.mxu0 %v1080
      %v1120 = vpop.f32.mrf.mxu0
      %v1121 = vadd.f32 0.0, %v1120
      %1122 = vmatmul.f32.gmra.mxu0 %v1083
      %v1123 = vpop.f32.mrf.mxu0
      %v1124 = vadd.f32 0.0, %v1123
      %1125 = vdwg.mxu0
      %1126 = vst.msk [vmem:[#allocation2 + $0x8] sm:$0xff] %vm979, %v1103
      %1127 = vst.msk [vmem:[#allocation2 + $0x18] sm:$0xff] %vm979, %v1106
      %1128 = vst.msk [vmem:[#allocation2 + $0x28] sm:$0xff] %vm979, %v1109
      %1129 = vst.msk [vmem:[#allocation2 + $0x38] sm:$0xff] %vm979, %v1112
      %1130 = vst.msk [vmem:[#allocation2 + $0x48] sm:$0xff] %vm979, %v1115
      %1131 = vst.msk [vmem:[#allocation2 + $0x58] sm:$0xff] %vm979, %v1118
      %1132 = vst.msk [vmem:[#allocation2 + $0x68] sm:$0xff] %vm979, %v1121
      %1133 = vst.msk [vmem:[#allocation2 + $0x78] sm:$0xff] %vm979, %v1124
      %v1134 = vld [vmem:[#allocation2] sm:$0xff]
      %v1135 = vld [vmem:[#allocation2 + $0x8] sm:$0xff]
      %v1136 = vld [vmem:[#allocation2 + $0x10] sm:$0xff]
      %v1137 = vld [vmem:[#allocation2 + $0x18] sm:$0xff]
      %v1138 = vld [vmem:[#allocation2 + $0x20] sm:$0xff]
      %v1139 = vld [vmem:[#allocation2 + $0x28] sm:$0xff]
      %v1140 = vld [vmem:[#allocation2 + $0x30] sm:$0xff]
      %v1141 = vld [vmem:[#allocation2 + $0x38] sm:$0xff]
      %v1142 = vld [vmem:[#allocation2 + $0x40] sm:$0xff]
      %v1143 = vld [vmem:[#allocation2 + $0x48] sm:$0xff]
      %v1144 = vld [vmem:[#allocation2 + $0x50] sm:$0xff]
      %v1145 = vld [vmem:[#allocation2 + $0x58] sm:$0xff]
      %v1146 = vld [vmem:[#allocation2 + $0x60] sm:$0xff]
      %v1147 = vld [vmem:[#allocation2 + $0x68] sm:$0xff]
      %v1148 = vld [vmem:[#allocation2 + $0x70] sm:$0xff]
      %v1149 = vld [vmem:[#allocation2 + $0x78] sm:$0xff]
      %v1150 = vld [vmem:[%s7] sm:$0xff]
      %v1151 = vld [vmem:[%s7 + $0x8] sm:$0xff]
      %v1152 = vld [vmem:[%s7 + $0x10] sm:$0xff]
      %v1153 = vld [vmem:[%s7 + $0x18] sm:$0xff]
      %v1154 = vld [vmem:[%s7 + $0x20] sm:$0xff]
      %v1155 = vld [vmem:[%s7 + $0x28] sm:$0xff]
      %v1156 = vld [vmem:[%s7 + $0x30] sm:$0xff]
      %v1157 = vld [vmem:[%s7 + $0x38] sm:$0xff]
      %v1158 = vld [vmem:[%s7 + $0x40] sm:$0xff]
      %v1159 = vld [vmem:[%s7 + $0x48] sm:$0xff]
      %v1160 = vld [vmem:[%s7 + $0x50] sm:$0xff]
      %v1161 = vld [vmem:[%s7 + $0x58] sm:$0xff]
      %v1162 = vld [vmem:[%s7 + $0x60] sm:$0xff]
      %v1163 = vld [vmem:[%s7 + $0x68] sm:$0xff]
      %v1164 = vld [vmem:[%s7 + $0x70] sm:$0xff]
      %v1165 = vld [vmem:[%s7 + $0x78] sm:$0xff]
      %v1166 = vld [vmem:[%s7 + $0x80] sm:$0xff]
      %v1167 = vld [vmem:[%s7 + $0x88] sm:$0xff]
      %v1168 = vld [vmem:[%s7 + $0x90] sm:$0xff]
      %v1169 = vld [vmem:[%s7 + $0x98] sm:$0xff]
      %v1170 = vld [vmem:[%s7 + $0xa0] sm:$0xff]
      %v1171 = vld [vmem:[%s7 + $0xa8] sm:$0xff]
      %v1172 = vld [vmem:[%s7 + $0xb0] sm:$0xff]
      %v1173 = vld [vmem:[%s7 + $0xb8] sm:$0xff]
      %v1174 = vld [vmem:[%s8] sm:$0x1]
      %v1176 = vperm.slane %v1174, 0
      %v1179 = vsel %vm979, %v1135, 0
      %v1182 = vsel %vm979, %v1137, 0
      %v1185 = vsel %vm979, %v1139, 0
      %v1188 = vsel %vm979, %v1141, 0
      %v1191 = vsel %vm979, %v1143, 0
      %v1194 = vsel %vm979, %v1145, 0
      %v1197 = vsel %vm979, %v1147, 0
      %v1200 = vsel %vm979, %v1149, 0
      %1202 = vmatpush.msra.mxu0 %v1165
      %1203 = vmatpush.msra.mxu0 %v1164
      %1204 = vmatpush.msra.mxu0 %v1163
      %1205 = vmatpush.msra.mxu0 %v1162
      %1206 = vmatpush.msra.mxu0 %v1161
      %1207 = vmatpush.msra.mxu0 %v1160
      %1208 = vmatpush.msra.mxu0 %v1159
      %1209 = vmatpush.msra.mxu0 %v1158
      %1210 = vmatpush.msra.mxu0 %v1157
      %1211 = vmatpush.msra.mxu0 %v1156
      %1212 = vmatpush.msra.mxu0 %v1155
      %1213 = vmatpush.msra.mxu0 %v1154
      %1214 = vmatpush.msra.mxu0 %v1153
      %1215 = vmatpush.msra.mxu0 %v1152
      %1216 = vmatpush.msra.mxu0 %v1151
      %1217 = vmatpush.msra.mxu0 %v1150
      %1218 = vmatmul.f32.gmra.mxu0 %v1134
      %v1219 = vpop.f32.mrf.mxu0
      %v1220 = vadd.f32 %v1176, %v1219
      %1221 = vmatmul.f32.gmra.mxu0 %v1136
      %v1222 = vpop.f32.mrf.mxu0
      %v1223 = vadd.f32 %v1176, %v1222
      %1224 = vmatmul.f32.gmra.mxu0 %v1138
      %v1225 = vpop.f32.mrf.mxu0
      %v1226 = vadd.f32 %v1176, %v1225
      %1227 = vmatmul.f32.gmra.mxu0 %v1140
      %v1228 = vpop.f32.mrf.mxu0
      %v1229 = vadd.f32 %v1176, %v1228
      %1230 = vmatmul.f32.gmra.mxu0 %v1142
      %v1231 = vpop.f32.mrf.mxu0
      %v1232 = vadd.f32 %v1176, %v1231
      %1233 = vmatmul.f32.gmra.mxu0 %v1144
      %v1234 = vpop.f32.mrf.mxu0
      %v1235 = vadd.f32 %v1176, %v1234
      %1236 = vmatmul.f32.gmra.mxu0 %v1146
      %v1237 = vpop.f32.mrf.mxu0
      %v1238 = vadd.f32 %v1176, %v1237
      %1239 = vmatmul.f32.gmra.mxu0 %v1148
      %v1240 = vpop.f32.mrf.mxu0
      %v1241 = vadd.f32 %v1176, %v1240
      %1242 = vdwg.mxu0
      %1243 = vmatpush.msra.mxu0 0.0
      %1244 = vmatpush.msra.mxu0 0.0
      %1245 = vmatpush.msra.mxu0 0.0
      %1246 = vmatpush.msra.mxu0 0.0
      %1247 = vmatpush.msra.mxu0 0.0
      %1248 = vmatpush.msra.mxu0 0.0
      %1249 = vmatpush.msra.mxu0 0.0
      %1250 = vmatpush.msra.mxu0 0.0
      %1251 = vmatpush.msra.mxu0 %v1173
      %1252 = vmatpush.msra.mxu0 %v1172
      %1253 = vmatpush.msra.mxu0 %v1171
      %1254 = vmatpush.msra.mxu0 %v1170
      %1255 = vmatpush.msra.mxu0 %v1169
      %1256 = vmatpush.msra.mxu0 %v1168
      %1257 = vmatpush.msra.mxu0 %v1167
      %1258 = vmatpush.msra.mxu0 %v1166
      %1259 = vmatmul.f32.gmra.mxu0 %v1179
      %v1260 = vpop.f32.mrf.mxu0
      %v1261 = vadd.f32 %v1220, %v1260
      %1262 = vmatmul.f32.gmra.mxu0 %v1182
      %v1263 = vpop.f32.mrf.mxu0
      %v1264 = vadd.f32 %v1223, %v1263
      %1265 = vmatmul.f32.gmra.mxu0 %v1185
      %v1266 = vpop.f32.mrf.mxu0
      %v1267 = vadd.f32 %v1226, %v1266
      %1268 = vmatmul.f32.gmra.mxu0 %v1188
      %v1269 = vpop.f32.mrf.mxu0
      %v1270 = vadd.f32 %v1229, %v1269
      %1271 = vmatmul.f32.gmra.mxu0 %v1191
      %v1272 = vpop.f32.mrf.mxu0
      %v1273 = vadd.f32 %v1232, %v1272
      %1274 = vmatmul.f32.gmra.mxu0 %v1194
      %v1275 = vpop.f32.mrf.mxu0
      %v1276 = vadd.f32 %v1235, %v1275
      %1277 = vmatmul.f32.gmra.mxu0 %v1197
      %v1278 = vpop.f32.mrf.mxu0
      %v1279 = vadd.f32 %v1238, %v1278
      %1280 = vmatmul.f32.gmra.mxu0 %v1200
      %v1281 = vpop.f32.mrf.mxu0
      %v1282 = vadd.f32 %v1241, %v1281
      %1283 = vdwg.mxu0
      %v1284 = vmax.f32 %v1261, 0.0
      %v1285 = vmax.f32 %v1264, 0.0
      %v1286 = vmax.f32 %v1267, 0.0
      %v1287 = vmax.f32 %v1270, 0.0
      %v1288 = vmax.f32 %v1273, 0.0
      %v1289 = vmax.f32 %v1276, 0.0
      %v1290 = vmax.f32 %v1279, 0.0
      %v1291 = vmax.f32 %v1282, 0.0
      %v1292 = vld [vmem:[%s9] sm:$0xff]
      %v1293 = vld [vmem:[%s9 + $0x8] sm:$0xff]
      %v1294 = vld [vmem:[%s9 + $0x10] sm:$0xff]
      %v1295 = vld [vmem:[%s9 + $0x18] sm:$0xff]
      %v1297 = vsel %vm979, %v1292, 0
      %v1300 = vsel %vm979, %v1293, 0
      %v1303 = vsel %vm979, %v1294, 0
      %v1306 = vsel %vm979, %v1295, 0
      %1308 = vmatpush.msra.mxu0 0.0
      %1309 = vmatpush.msra.mxu0 0.0
      %1310 = vmatpush.msra.mxu0 0.0
      %1311 = vmatpush.msra.mxu0 0.0
      %1312 = vmatpush.msra.mxu0 0.0
      %1313 = vmatpush.msra.mxu0 0.0
      %1314 = vmatpush.msra.mxu0 0.0
      %1315 = vmatpush.msra.mxu0 0.0
      %1316 = vmatpush.msra.mxu0 %v1291
      %1317 = vmatpush.msra.mxu0 %v1290
      %1318 = vmatpush.msra.mxu0 %v1289
      %1319 = vmatpush.msra.mxu0 %v1288
      %1320 = vmatpush.msra.mxu0 %v1287
      %1321 = vmatpush.msra.mxu0 %v1286
      %1322 = vmatpush.msra.mxu0 %v1285
      %1323 = vmatpush.msra.mxu0 %v1284
      %1324 = vmatmul.f32.gmra.mxu0 %v1297
      %v1325 = vpop.f32.mrf.mxu0
      %v1326 = vadd.f32 0.0, %v1325
      %1327 = vmatmul.f32.gmra.mxu0 %v1300
      %v1328 = vpop.f32.mrf.mxu0
      %v1329 = vadd.f32 0.0, %v1328
      %1330 = vmatmul.f32.gmra.mxu0 %v1303
      %v1331 = vpop.f32.mrf.mxu0
      %v1332 = vadd.f32 0.0, %v1331
      %1333 = vmatmul.f32.gmra.mxu0 %v1306
      %v1334 = vpop.f32.mrf.mxu0
      %v1335 = vadd.f32 0.0, %v1334
      %1336 = vdwg.mxu0
      %v1337 = vld [vmem:[%s10] sm:$0xff]
      %v1338 = vld [vmem:[%s10 + $0x8] sm:$0xff]
      %v1339 = vld [vmem:[%s10 + $0x10] sm:$0xff]
      %v1340 = vld [vmem:[%s10 + $0x18] sm:$0xff]
      %v1342 = vsel %vm979, %v1337, 0
      %v1345 = vsel %vm979, %v1338, 0
      %v1348 = vsel %vm979, %v1339, 0
      %v1351 = vsel %vm979, %v1340, 0
      %1353 = vmatpush.msra.mxu0 0.0
      %1354 = vmatpush.msra.mxu0 0.0
      %1355 = vmatpush.msra.mxu0 0.0
      %1356 = vmatpush.msra.mxu0 0.0
      %1357 = vmatpush.msra.mxu0 0.0
      %1358 = vmatpush.msra.mxu0 0.0
      %1359 = vmatpush.msra.mxu0 0.0
      %1360 = vmatpush.msra.mxu0 0.0
      %1361 = vmatpush.msra.mxu0 %v1291
      %1362 = vmatpush.msra.mxu0 %v1290
      %1363 = vmatpush.msra.mxu0 %v1289
      %1364 = vmatpush.msra.mxu0 %v1288
      %1365 = vmatpush.msra.mxu0 %v1287
      %1366 = vmatpush.msra.mxu0 %v1286
      %1367 = vmatpush.msra.mxu0 %v1285
      %1368 = vmatpush.msra.mxu0 %v1284
      %1369 = vmatmul.f32.gmra.mxu0 %v1342
      %v1370 = vpop.f32.mrf.mxu0
      %v1371 = vadd.f32 0.0, %v1370
      %1372 = vmatmul.f32.gmra.mxu0 %v1345
      %v1373 = vpop.f32.mrf.mxu0
      %v1374 = vadd.f32 0.0, %v1373
      %1375 = vmatmul.f32.gmra.mxu0 %v1348
      %v1376 = vpop.f32.mrf.mxu0
      %v1377 = vadd.f32 0.0, %v1376
      %1378 = vmatmul.f32.gmra.mxu0 %v1351
      %v1379 = vpop.f32.mrf.mxu0
      %v1380 = vadd.f32 0.0, %v1379
      %1381 = vdwg.mxu0
      %v1382 = vmax.f32 %v1326, %v1371
      %v1383 = vmax.f32 %v1329, %v1374
      %v1384 = vmax.f32 %v1332, %v1377
      %v1385 = vmax.f32 %v1335, %v1380
      %v1386 = vld [vmem:[%s11] sm:$0xff]
      %v1387 = vld [vmem:[%s11 + $0x8] sm:$0xff]
      %v1388 = vld [vmem:[%s11 + $0x10] sm:$0xff]
      %v1389 = vld [vmem:[%s11 + $0x18] sm:$0xff]
      %v1390 = vld [vmem:[%s11 + $0x20] sm:$0xff]
      %v1391 = vld [vmem:[%s11 + $0x28] sm:$0xff]
      %v1392 = vld [vmem:[%s11 + $0x30] sm:$0xff]
      %v1393 = vld [vmem:[%s11 + $0x38] sm:$0xff]
      %v1394 = vld [vmem:[%s11 + $0x40] sm:$0xff]
      %v1395 = vld [vmem:[%s11 + $0x48] sm:$0xff]
      %v1396 = vld [vmem:[%s11 + $0x50] sm:$0xff]
      %v1397 = vld [vmem:[%s11 + $0x58] sm:$0xff]
      %v1398 = vld [vmem:[%s11 + $0x60] sm:$0xff]
      %v1399 = vld [vmem:[%s11 + $0x68] sm:$0xff]
      %v1400 = vld [vmem:[%s11 + $0x70] sm:$0xff]
      %v1401 = vld [vmem:[%s11 + $0x78] sm:$0xff]
      %v1402 = vld [vmem:[%s12] sm:$0x1]
      %v1404 = vperm.slane %v1402, 0
      %1406 = vmatpush.msra.mxu0 %v1401
      %1407 = vmatpush.msra.mxu0 %v1400
      %1408 = vmatpush.msra.mxu0 %v1399
      %1409 = vmatpush.msra.mxu0 %v1398
      %1410 = vmatpush.msra.mxu0 %v1397
      %1411 = vmatpush.msra.mxu0 %v1396
      %1412 = vmatpush.msra.mxu0 %v1395
      %1413 = vmatpush.msra.mxu0 %v1394
      %1414 = vmatpush.msra.mxu0 %v1393
      %1415 = vmatpush.msra.mxu0 %v1392
      %1416 = vmatpush.msra.mxu0 %v1391
      %1417 = vmatpush.msra.mxu0 %v1390
      %1418 = vmatpush.msra.mxu0 %v1389
      %1419 = vmatpush.msra.mxu0 %v1388
      %1420 = vmatpush.msra.mxu0 %v1387
      %1421 = vmatpush.msra.mxu0 %v1386
      %1422 = vmatmul.f32.gmra.mxu0 %v1382
      %v1423 = vpop.f32.mrf.mxu0
      %v1424 = vadd.f32 %v1404, %v1423
      %1425 = vmatmul.f32.gmra.mxu0 %v1383
      %v1426 = vpop.f32.mrf.mxu0
      %v1427 = vadd.f32 %v1404, %v1426
      %1428 = vmatmul.f32.gmra.mxu0 %v1384
      %v1429 = vpop.f32.mrf.mxu0
      %v1430 = vadd.f32 %v1404, %v1429
      %1431 = vmatmul.f32.gmra.mxu0 %v1385
      %v1432 = vpop.f32.mrf.mxu0
      %v1433 = vadd.f32 %v1404, %v1432
      %1434 = vdwg.mxu0
      %v1435 = vld [vmem:[%s13] sm:$0xff]
      %v1436 = vld [vmem:[%s13 + $0x8] sm:$0xff]
      %v1437 = vld [vmem:[%s13 + $0x10] sm:$0xff]
      %v1438 = vld [vmem:[%s13 + $0x18] sm:$0xff]
      %v1439 = vld [vmem:[%s15] sm:$0x1]
      %v1441 = vperm.slane %v1439, 0
      %vm1443 = vcmask 261120
      %v1445 = vsel %vm1443, %v1424, 0
      %v1448 = vsel %vm1443, %v1427, 0
      %v1451 = vsel %vm1443, %v1430, 0
      %v1454 = vsel %vm1443, %v1433, 0
      %1456 = vmatpush.msra.mxu0 0.0
      %1457 = vmatpush.msra.mxu0 0.0
      %1458 = vmatpush.msra.mxu0 0.0
      %1459 = vmatpush.msra.mxu0 0.0
      %1460 = vmatpush.msra.mxu0 0.0
      %1461 = vmatpush.msra.mxu0 0.0
      %1462 = vmatpush.msra.mxu0 0.0
      %1463 = vmatpush.msra.mxu0 0.0
      %1464 = vmatpush.msra.mxu0 0.0
      %1465 = vmatpush.msra.mxu0 0.0
      %1466 = vmatpush.msra.mxu0 0.0
      %1467 = vmatpush.msra.mxu0 0.0
      %1468 = vmatpush.msra.mxu0 %v1438
      %1469 = vmatpush.msra.mxu0 %v1437
      %1470 = vmatpush.msra.mxu0 %v1436
      %1471 = vmatpush.msra.mxu0 %v1435
      %1472 = vmatmul.f32.gmra.mxu0 %v1445
      %v1473 = vpop.f32.mrf.mxu0
      %v1474 = vadd.f32 %v1441, %v1473
      %1475 = vmatmul.f32.gmra.mxu0 %v1448
      %v1476 = vpop.f32.mrf.mxu0
      %v1477 = vadd.f32 %v1441, %v1476
      %1478 = vmatmul.f32.gmra.mxu0 %v1451
      %v1479 = vpop.f32.mrf.mxu0
      %v1480 = vadd.f32 %v1441, %v1479
      %1481 = vmatmul.f32.gmra.mxu0 %v1454
      %v1482 = vpop.f32.mrf.mxu0
      %v1483 = vadd.f32 %v1441, %v1482
      %1484 = vdwg.mxu0
      %v1485 = vld [vmem:[%s14] sm:$0xff]
      %v1486 = vld [vmem:[%s14 + $0x8] sm:$0xff]
      %v1487 = vld [vmem:[%s14 + $0x10] sm:$0xff]
      %v1488 = vld [vmem:[%s14 + $0x18] sm:$0xff]
      %v1490 = vsel %vm1443, 0.0, 0
      %1492 = vmatpush.msra.mxu0 0.0
      %1493 = vmatpush.msra.mxu0 0.0
      %1494 = vmatpush.msra.mxu0 0.0
      %1495 = vmatpush.msra.mxu0 0.0
      %1496 = vmatpush.msra.mxu0 0.0
      %1497 = vmatpush.msra.mxu0 0.0
      %1498 = vmatpush.msra.mxu0 0.0
      %1499 = vmatpush.msra.mxu0 0.0
      %1500 = vmatpush.msra.mxu0 0.0
      %1501 = vmatpush.msra.mxu0 0.0
      %1502 = vmatpush.msra.mxu0 0.0
      %1503 = vmatpush.msra.mxu0 0.0
      %1504 = vmatpush.msra.mxu0 %v1488
      %1505 = vmatpush.msra.mxu0 %v1487
      %1506 = vmatpush.msra.mxu0 %v1486
      %1507 = vmatpush.msra.mxu0 %v1485
      %1508 = vmatmul.f32.gmra.mxu0 %v1490
      %v1509 = vpop.f32.mrf.mxu0
      %v1510 = vadd.f32 0.0, %v1509
      %1511 = vdwg.mxu0
      %v1512 = vadd.f32 %v1474, %v1510
      %v1513 = vsub.f32 0.0, %v1512
      %v1514 = vmul.f32 %v1513, 1.442695
      %v1515 = vpow.pop %v1514
      %v1516 = vadd.f32 %v1515, 1.0
      %v1517 = vrcp.pop %v1516
      %v1518 = vtanh.pop %v1512
      %v1519 = vmul.f32 %v1517, 0.0
      %1521 = vrot.lane.b32.xlu0 %v1518, 64
      %v1522 = vpop.permute.xlu0 %1521
      %v1524 = vmul.f32 %v1517, %v1522
      %1526 = vrot.lane.b32.xlu0 %v1524, 32
      %v1527 = vpop.permute.xlu0 %1526
      %v1529 = vadd.f32 %v1519, %v1527
      %v1530 = vtanh.pop %v1529
      %1532 = vrot.lane.b32.xlu0 %v1530, 64
      %v1533 = vpop.permute.xlu0 %1532
      %v1535 = vmul.f32 %v1517, %v1533
      %1537 = vrot.lane.b32.xlu0 %v1535, 32
      %v1538 = vpop.permute.xlu0 %1537
      %1540 = vst.msk [vmem:[#allocation3] sm:$0xff] %vm1443, %v1538
      %v1541 = vsel %vm1443, %v1538, 0
      %1543 = vmatpush.msra.mxu0 0.0
      %1544 = vmatpush.msra.mxu0 0.0
      %1545 = vmatpush.msra.mxu0 0.0
      %1546 = vmatpush.msra.mxu0 0.0
      %1547 = vmatpush.msra.mxu0 0.0
      %1548 = vmatpush.msra.mxu0 0.0
      %1549 = vmatpush.msra.mxu0 0.0
      %1550 = vmatpush.msra.mxu0 0.0
      %1551 = vmatpush.msra.mxu0 0.0
      %1552 = vmatpush.msra.mxu0 0.0
      %1553 = vmatpush.msra.mxu0 0.0
      %1554 = vmatpush.msra.mxu0 0.0
      %1555 = vmatpush.msra.mxu0 %v1488
      %1556 = vmatpush.msra.mxu0 %v1487
      %1557 = vmatpush.msra.mxu0 %v1486
      %1558 = vmatpush.msra.mxu0 %v1485
      %1559 = vmatmul.f32.gmra.mxu0 %v1541
      %v1560 = vpop.f32.mrf.mxu0
      %v1561 = vadd.f32 0.0, %v1560
      %1562 = vdwg.mxu0
      %v1563 = vadd.f32 %v1477, %v1561
      %v1564 = vsub.f32 0.0, %v1563
      %v1565 = vmul.f32 %v1564, 1.442695
      %v1566 = vpow.pop %v1565
      %v1567 = vadd.f32 %v1566, 1.0
      %v1568 = vrcp.pop %v1567
      %v1569 = vtanh.pop %v1563
      %v1570 = vmul.f32 %v1568, %v1529
      %1572 = vrot.lane.b32.xlu0 %v1569, 64
      %v1573 = vpop.permute.xlu0 %1572
      %v1575 = vmul.f32 %v1568, %v1573
      %1577 = vrot.lane.b32.xlu0 %v1575, 32
      %v1578 = vpop.permute.xlu0 %1577
      %v1580 = vadd.f32 %v1570, %v1578
      %v1581 = vtanh.pop %v1580
      %1583 = vrot.lane.b32.xlu0 %v1581, 64
      %v1584 = vpop.permute.xlu0 %1583
      %v1586 = vmul.f32 %v1568, %v1584
      %1588 = vrot.lane.b32.xlu0 %v1586, 32
      %v1589 = vpop.permute.xlu0 %1588
      %1591 = vst.msk [vmem:[#allocation3 + $0x8] sm:$0xff] %vm1443, %v1589
      %v1592 = vsel %vm1443, %v1589, 0
      %1594 = vmatpush.msra.mxu0 0.0
      %1595 = vmatpush.msra.mxu0 0.0
      %1596 = vmatpush.msra.mxu0 0.0
      %1597 = vmatpush.msra.mxu0 0.0
      %1598 = vmatpush.msra.mxu0 0.0
      %1599 = vmatpush.msra.mxu0 0.0
      %1600 = vmatpush.msra.mxu0 0.0
      %1601 = vmatpush.msra.mxu0 0.0
      %1602 = vmatpush.msra.mxu0 0.0
      %1603 = vmatpush.msra.mxu0 0.0
      %1604 = vmatpush.msra.mxu0 0.0
      %1605 = vmatpush.msra.mxu0 0.0
      %1606 = vmatpush.msra.mxu0 %v1488
      %1607 = vmatpush.msra.mxu0 %v1487
      %1608 = vmatpush.msra.mxu0 %v1486
      %1609 = vmatpush.msra.mxu0 %v1485
      %1610 = vmatmul.f32.gmra.mxu0 %v1592
      %v1611 = vpop.f32.mrf.mxu0
      %v1612 = vadd.f32 0.0, %v1611
      %1613 = vdwg.mxu0
      %v1614 = vadd.f32 %v1480, %v1612
      %v1615 = vsub.f32 0.0, %v1614
      %v1616 = vmul.f32 %v1615, 1.442695
      %v1617 = vpow.pop %v1616
      %v1618 = vadd.f32 %v1617, 1.0
      %v1619 = vrcp.pop %v1618
      %v1620 = vtanh.pop %v1614
      %v1621 = vmul.f32 %v1619, %v1580
      %1623 = vrot.lane.b32.xlu0 %v1620, 64
      %v1624 = vpop.permute.xlu0 %1623
      %v1626 = vmul.f32 %v1619, %v1624
      %1628 = vrot.lane.b32.xlu0 %v1626, 32
      %v1629 = vpop.permute.xlu0 %1628
      %v1631 = vadd.f32 %v1621, %v1629
      %v1632 = vtanh.pop %v1631
      %1634 = vrot.lane.b32.xlu0 %v1632, 64
      %v1635 = vpop.permute.xlu0 %1634
      %v1637 = vmul.f32 %v1619, %v1635
      %1639 = vrot.lane.b32.xlu0 %v1637, 32
      %v1640 = vpop.permute.xlu0 %1639
      %1642 = vst.msk [vmem:[#allocation3 + $0x10] sm:$0xff] %vm1443, %v1640
      %v1643 = vsel %vm1443, %v1640, 0
      %1645 = vmatpush.msra.mxu0 0.0
      %1646 = vmatpush.msra.mxu0 0.0
      %1647 = vmatpush.msra.mxu0 0.0
      %1648 = vmatpush.msra.mxu0 0.0
      %1649 = vmatpush.msra.mxu0 0.0
      %1650 = vmatpush.msra.mxu0 0.0
      %1651 = vmatpush.msra.mxu0 0.0
      %1652 = vmatpush.msra.mxu0 0.0
      %1653 = vmatpush.msra.mxu0 0.0
      %1654 = vmatpush.msra.mxu0 0.0
      %1655 = vmatpush.msra.mxu0 0.0
      %1656 = vmatpush.msra.mxu0 0.0
      %1657 = vmatpush.msra.mxu0 %v1488
      %1658 = vmatpush.msra.mxu0 %v1487
      %1659 = vmatpush.msra.mxu0 %v1486
      %1660 = vmatpush.msra.mxu0 %v1485
      %1661 = vmatmul.f32.gmra.mxu0 %v1643
      %v1662 = vpop.f32.mrf.mxu0
      %v1663 = vadd.f32 0.0, %v1662
      %1664 = vdwg.mxu0
      %v1665 = vadd.f32 %v1483, %v1663
      %v1666 = vsub.f32 0.0, %v1665
      %v1667 = vmul.f32 %v1666, 1.442695
      %v1668 = vpow.pop %v1667
      %v1669 = vadd.f32 %v1668, 1.0
      %v1670 = vrcp.pop %v1669
      %v1671 = vtanh.pop %v1665
      %v1672 = vmul.f32 %v1670, %v1631
      %1674 = vrot.lane.b32.xlu0 %v1671, 64
      %v1675 = vpop.permute.xlu0 %1674
      %v1677 = vmul.f32 %v1670, %v1675
      %1679 = vrot.lane.b32.xlu0 %v1677, 32
      %v1680 = vpop.permute.xlu0 %1679
      %v1682 = vadd.f32 %v1672, %v1680
      %v1683 = vtanh.pop %v1682
      %1685 = vrot.lane.b32.xlu0 %v1683, 64
      %v1686 = vpop.permute.xlu0 %1685
      %v1688 = vmul.f32 %v1670, %v1686
      %1690 = vrot.lane.b32.xlu0 %v1688, 32
      %v1691 = vpop.permute.xlu0 %1690
      %1693 = vst.msk [vmem:[#allocation3 + $0x18] sm:$0xff] %vm1443, %v1691
      %v1694 = vld [vmem:[#allocation3] sm:$0xff]
      %v1695 = vld [vmem:[#allocation3 + $0x8] sm:$0xff]
      %v1696 = vld [vmem:[#allocation3 + $0x10] sm:$0xff]
      %v1697 = vld [vmem:[#allocation3 + $0x18] sm:$0xff]
      %v1698 = vld [vmem:[%s16] sm:$0xff]
      %v1699 = vld [vmem:[%s16 + $0x8] sm:$0xff]
      %v1700 = vld [vmem:[%s16 + $0x10] sm:$0xff]
      %v1701 = vld [vmem:[%s16 + $0x18] sm:$0xff]
      %v1702 = vld [vmem:[%s17] sm:$0x1]
      %v1704 = vperm.slane %v1702, 0
      %v1707 = vsel %vm1443, %v1694, 0
      %v1710 = vsel %vm1443, %v1695, 0
      %v1713 = vsel %vm1443, %v1696, 0
      %v1716 = vsel %vm1443, %v1697, 0
      %1718 = vmatpush.msra.mxu0 0.0
      %1719 = vmatpush.msra.mxu0 0.0
      %1720 = vmatpush.msra.mxu0 0.0
      %1721 = vmatpush.msra.mxu0 0.0
      %1722 = vmatpush.msra.mxu0 0.0
      %1723 = vmatpush.msra.mxu0 0.0
      %1724 = vmatpush.msra.mxu0 0.0
      %1725 = vmatpush.msra.mxu0 0.0
      %1726 = vmatpush.msra.mxu0 0.0
      %1727 = vmatpush.msra.mxu0 0.0
      %1728 = vmatpush.msra.mxu0 0.0
      %1729 = vmatpush.msra.mxu0 0.0
      %1730 = vmatpush.msra.mxu0 %v1701
      %1731 = vmatpush.msra.mxu0 %v1700
      %1732 = vmatpush.msra.mxu0 %v1699
      %1733 = vmatpush.msra.mxu0 %v1698
      %1734 = vmatmul.f32.gmra.mxu0 %v1707
      %v1735 = vpop.f32.mrf.mxu0
      %v1736 = vadd.f32 %v1704, %v1735
      %1737 = vmatmul.f32.gmra.mxu0 %v1710
      %v1738 = vpop.f32.mrf.mxu0
      %v1739 = vadd.f32 %v1704, %v1738
      %1740 = vmatmul.f32.gmra.mxu0 %v1713
      %v1741 = vpop.f32.mrf.mxu0
      %v1742 = vadd.f32 %v1704, %v1741
      %1743 = vmatmul.f32.gmra.mxu0 %v1716
      %v1744 = vpop.f32.mrf.mxu0
      %v1745 = vadd.f32 %v1704, %v1744
      %1746 = vdwg.mxu0
      %v1747 = vmax.f32 %v1736, %v1739
      %v1748 = vmax.f32 %v1747, %v1742
      %v1749 = vmax.f32 %v1748, %v1745
      %v1750 = vsub.f32 %v1736, %v1749
      %v1751 = vmul.f32 %v1750, 1.442695
      %v1752 = vpow.pop %v1751
      %v1753 = vsub.f32 %v1739, %v1749
      %v1754 = vmul.f32 %v1753, 1.442695
      %v1755 = vpow.pop %v1754
      %v1756 = vsub.f32 %v1742, %v1749
      %v1757 = vmul.f32 %v1756, 1.442695
      %v1758 = vpow.pop %v1757
      %v1759 = vsub.f32 %v1745, %v1749
      %v1760 = vmul.f32 %v1759, 1.442695
      %v1761 = vpow.pop %v1760
      %v1762 = vadd.f32 %v1752, %v1755
      %v1763 = vadd.f32 %v1762, %v1758
      %v1764 = vadd.f32 %v1763, %v1761
      %v1765 = vrcp.pop %v1764
      %v1766 = vmul.f32 %v1752, %v1765
      %1767 = vst.msk [vmem:[%s667] sm:$0xff] %vm1443, %v1766
      %v1768 = vmul.f32 %v1766, %v1694
      %v1769 = vadd.f32 %v1768, 0.0
      %v1770 = vmul.f32 %v1755, %v1765
      %1772 = vrot.lane.b32.xlu0 %v1770, 32
      %v1773 = vpop.permute.xlu0 %1772
      %vm1775 = vcmask 523520
      %1776 = vst.msk [vmem:[%s667] sm:$0xff] %vm1775, %v1773
      %v1777 = vmul.f32 %v1770, %v1695
      %v1778 = vadd.f32 %v1769, %v1777
      %v1779 = vmul.f32 %v1758, %v1765
      %1781 = vrot.lane.b32.xlu0 %v1779, 64
      %v1782 = vpop.permute.xlu0 %1781
      %vm1784 = vcmask 785920
      %1785 = vst.msk [vmem:[%s667] sm:$0xff] %vm1784, %v1782
      %v1786 = vmul.f32 %v1779, %v1696
      %v1787 = vadd.f32 %v1778, %v1786
      %v1788 = vmul.f32 %v1761, %v1765
      %1790 = vrot.lane.b32.xlu0 %v1788, 96
      %v1791 = vpop.permute.xlu0 %1790
      %vm1793 = vcmask 1048320
      %1794 = vst.msk [vmem:[%s667] sm:$0xff] %vm1793, %v1791
      %v1795 = vmul.f32 %v1788, %v1697
      %v1796 = vadd.f32 %v1787, %v1795
      %v1797 = vld [vmem:[%s18] sm:$0xff]
      %v1798 = vld [vmem:[%s18 + $0x8] sm:$0xff]
      %v1799 = vld [vmem:[%s18 + $0x10] sm:$0xff]
      %v1800 = vld [vmem:[%s18 + $0x18] sm:$0xff]
      %v1801 = vld [vmem:[%s19] sm:$0x1]
      %v1803 = vperm.slane %v1801, 0
      %v1806 = vsel %vm1443, %v1796, 0
      %1808 = vmatpush.msra.mxu0 0.0
      %1809 = vmatpush.msra.mxu0 0.0
      %1810 = vmatpush.msra.mxu0 0.0
      %1811 = vmatpush.msra.mxu0 0.0
      %1812 = vmatpush.msra.mxu0 0.0
      %1813 = vmatpush.msra.mxu0 0.0
      %1814 = vmatpush.msra.mxu0 0.0
      %1815 = vmatpush.msra.mxu0 0.0
      %1816 = vmatpush.msra.mxu0 0.0
      %1817 = vmatpush.msra.mxu0 0.0
      %1818 = vmatpush.msra.mxu0 0.0
      %1819 = vmatpush.msra.mxu0 0.0
      %1820 = vmatpush.msra.mxu0 %v1800
      %1821 = vmatpush.msra.mxu0 %v1799
      %1822 = vmatpush.msra.mxu0 %v1798
      %1823 = vmatpush.msra.mxu0 %v1797
      %1824 = vmatmul.f32.gmra.mxu0 %v1806
      %v1825 = vpop.f32.mrf.mxu0
      %v1826 = vadd.f32 %v1803, %v1825
      %1827 = vdwg.mxu0
      %1828 = vst [vmem:[%s663] sm:$0xff] %v1826
      %p1829 = scmp.lt.s32.totalorder %s33, 1
      %s1830 = scalar_select %p1829, %s33, 1
      %s1831 = smul.addr %s1830, 8
      %s1832 = scalar_lea.vmem %s20, %s1831
      %p1833 = scmp.lt.s32.totalorder %s33, 1
      %s1834 = scalar_select %p1833, %s33, 1
      %s1835 = smul.addr %s1834, 8
      %s1836 = scalar_lea.vmem %s21, %s1835
      // Predicated region
      $region101: #{conv_lstm_attention.1} parent=99 // pred_check
        %p1837 = pneg %p476
      $region102: #{conv_lstm_attention.1} parent=99 // pred_check_branch
        %1839 = sbr.rel (%p1837) target = $region104
      $region103: #{conv_lstm_attention.1} parent=99 // pred_region
        _
      $region104: #{conv_lstm_attention.1} parent=99 // pred_fallthru
        _
      // Predicated region
      $region105: #{conv_lstm_attention.1} parent=99 // pred_check
        %p1840 = pneg %p502
      $region106: #{conv_lstm_attention.1} parent=99 // pred_check_branch
        %1842 = sbr.rel (%p1840) target = $region108
      $region107: #{conv_lstm_attention.1} parent=99 // pred_region
        _
      $region108: #{conv_lstm_attention.1} parent=99 // pred_fallthru
        _
    $region100: #{conv_lstm_attention.1} parent=5 // pred_fallthru
      _
    %p1843 = scmp.le.s32.totalorder 2, %s28
    // Predicated region
    $region109: #{conv_lstm_attention.1} parent=5 // pred_check
      %p1844 = pneg %p1843
    $region110: #{conv_lstm_attention.1} parent=5 // pred_check_branch
      %1846 = sbr.rel (%p1844) target = $region112
    $region111: #{conv_lstm_attention.1} parent=5 // pred_region
      %s1847 = ssub.s32 %s28, 2
      // Predicated region
      $region113: #{conv_lstm_attention.1} parent=111 // pred_check
        %p1848 = pneg %p482
      $region114: #{conv_lstm_attention.1} parent=111 // pred_check_branch
        %1850 = sbr.rel (%p1848) target = $region116
      $region115: #{conv_lstm_attention.1} parent=111 // pred_region
        %p1851 = scmp.lt.s32.totalorder %s34, 1
        %s1852 = scalar_select %p1851, %s34, 1
        %s1853 = smul.addr %s1852, 8
        %s1854 = scalar_lea.vmem %s20, %s1853
      $region116: #{conv_lstm_attention.1} parent=111 // pred_fallthru
        _
      // Predicated region
      $region117: #{conv_lstm_attention.1} parent=111 // pred_check
        %p1855 = pneg %p508
      $region118: #{conv_lstm_attention.1} parent=111 // pred_check_branch
        %1857 = sbr.rel (%p1855) target = $region120
      $region119: #{conv_lstm_attention.1} parent=111 // pred_region
        %p1858 = scmp.lt.s32.totalorder %s34, 1
        %s1859 = scalar_select %p1858, %s34, 1
        %s1860 = smul.addr %s1859, 8
        %s1861 = scalar_lea.vmem %s21, %s1860
      $region120: #{conv_lstm_attention.1} parent=111 // pred_fallthru
        _
    $region112: #{conv_lstm_attention.1} parent=5 // pred_fallthru
      _
  $region6: #{conv_lstm_attention.1} parent=0 // loop_footer
    %s32 = sadd.s32 1, %s28
  $region7: #{conv_lstm_attention.1} parent=0 // loop_footer_branch
    %27 = sbr.rel target = $region3
  $region8: #{conv_lstm_attention.1} parent=0 // loop_exit
    _

</llo_original>
